<compile_context>
chip_gen: v7x
topology: tpu7x:2x2x1
jax: 0.10.0
libtpu: 0.0.40
codegen_flags: <defaults>
</compile_context>

<pallas_src>
import numpy as np

import jax
import jax.numpy as jnp
from jax.experimental import pallas as pl
from jax.experimental.pallas import tpu as pltpu


# ----------------------------------------------------------------------------
# Pallas kernel (feature-major: activations are (E, BB*N), nodes on lanes)
# ----------------------------------------------------------------------------
def make_s2v_kernel(T, n_pre, n_post, reg_hidden, N, E, BB, H):
    f32 = jnp.float32
    ROWS = BB * N

    def kernel(*refs):
        if reg_hidden > 0:
            (xv_ref, adjT_ref, rep_ref, bmask_ref, sel_ng_ref, sel_gn_ref,
             w_ref, b_ref, rw_ref, rv_ref, out_ref) = refs
        else:
            (xv_ref, adjT_ref, rep_ref, bmask_ref, sel_ng_ref, sel_gn_ref,
             w_ref, b_ref, rv_ref, out_ref) = refs

        xv_row = xv_ref[0]                                       # (1, ROWS) f32

        # Block-diagonal transposed adjacency, built with ONE bf16 MXU matmul
        # (0/1 values -> exact) and one f32 mask multiply.
        adjT_rep = jnp.dot(adjT_ref[0], rep_ref[...],
                           preferred_element_type=f32)           # (ROWS, ROWS)
        a_bdT = adjT_rep * bmask_ref[...]                        # block-diagonal

        # ---- unpack packed parameters (static offsets) ----
        # weights are stored out-major (torch layout) so Linear == W @ x_fm;
        # biases are stored as columns so they broadcast over the lane axis.
        mu1_col = b_ref[:, 0:1]                                  # (E, 1)
        pre_w = [w_ref[i] for i in range(n_pre)]
        post_w = [w_ref[n_pre + i] for i in range(n_post)]
        mu2_w = w_ref[n_pre + n_post]
        pre_b = [b_ref[:, 1 + i:2 + i] for i in range(n_pre)]
        post_b = [b_ref[:, 1 + n_pre + i:2 + n_pre + i] for i in range(n_post)]
        mu2_b = b_ref[:, 1 + n_pre + n_post:2 + n_pre + n_post]

        # hoist bias broadcasts out of the unrolled T loop (no per-iter bcast)
        pre_hb = [jnp.broadcast_to(b, (E, ROWS)) for b in pre_b]
        post_hb = [jnp.broadcast_to(b, (E, ROWS)) for b in post_b]
        mu2_hb = jnp.broadcast_to(mu2_b, (E, ROWS))

        # ---- message passing (T is a compile-time constant; unrolled) ----
        xvmu1 = jnp.maximum(mu1_col * xv_row, 0.0)               # (E, ROWS)
        mu = xvmu1
        for _ in range(1, T):
            m = mu
            for k in range(n_pre):
                m = jnp.maximum(
                    jnp.dot(pre_w[k], m, preferred_element_type=f32)
                    + pre_hb[k], 0.0)
            mu_pool = jnp.dot(m, a_bdT, preferred_element_type=f32)   # (E, ROWS)
            for k in range(n_post):
                mu_pool = jnp.maximum(
                    jnp.dot(post_w[k], mu_pool, preferred_element_type=f32)
                    + post_hb[k], 0.0)
            mu2 = jnp.dot(mu2_w, mu_pool, preferred_element_type=f32) + mu2_hb
            mu = jnp.maximum(xvmu1 + mu2, 0.0)                   # (E, ROWS)

        # ---- readout ----
        # per-graph pooled feature: (E, BB) = (mu * xv) @ node->graph selector
        pooled = jnp.dot(mu * xv_row, sel_ng_ref[...],
                         preferred_element_type=f32)             # (E, BB)

        if reg_hidden > 0:
            # q_1 / q_2 are folded offline into q_reg (no nonlinearity between):
            #   W1k = Wreg_a @ W_q1, W2k = Wreg_b @ W_q2,
            #   b_fold = Wreg_a @ b_q1 + Wreg_b @ b_q2 + b_reg.
            W1k = rw_ref[0:H, :]                                 # (H, E)
            W2k = rw_ref[H:2 * H, :]                             # (H, E)
            b_fold = rv_ref[:, 0:1]                              # (H, 1)
            q_w = rv_ref[:, 1:2]                                 # (H, 1)
            q_b = rv_ref[0:1, 2:3]                               # (1, 1)

            q1h = jnp.dot(W1k, pooled, preferred_element_type=f32) + b_fold   # (H, BB)
            q1h_nodes = jnp.dot(q1h, sel_gn_ref[...],
                                preferred_element_type=f32)      # (H, ROWS)
            q2h = jnp.dot(W2k, mu, preferred_element_type=f32)   # (H, ROWS)
            qreg = jnp.maximum(q1h_nodes + q2h, 0.0)             # (H, ROWS)
            # final (H -> 1) layer, lane-dense output row
            out_ref[0] = jnp.sum(q_w * qreg, axis=0, keepdims=True) + q_b
        else:
            q1_w = w_ref[n_pre + n_post + 1]
            q2_w = w_ref[n_pre + n_post + 2]
            q1_b = b_ref[:, 2 + n_pre + n_post:3 + n_pre + n_post]
            q2_b = b_ref[:, 3 + n_pre + n_post:4 + n_pre + n_post]
            q_wa = rv_ref[:, 0:1]                                # (E, 1)
            q_wb = rv_ref[:, 1:2]                                # (E, 1)
            q_b = rv_ref[0:1, 2:3]                               # (1, 1)

            q1 = jnp.maximum(
                jnp.dot(q1_w, pooled, preferred_element_type=f32) + q1_b, 0.0)  # (E, BB)
            q2 = jnp.maximum(
                jnp.dot(q2_w, mu, preferred_element_type=f32)
                + jnp.broadcast_to(q2_b, (E, ROWS)), 0.0)                       # (E, ROWS)
            c1 = jnp.sum(q_wa * q1, axis=0, keepdims=True)       # (1, BB)
            c1_nodes = jnp.dot(c1, sel_gn_ref[...],
                               preferred_element_type=f32)       # (1, ROWS)
            c2 = jnp.sum(q_wb * q2, axis=0, keepdims=True)       # (1, ROWS)
            out_ref[0] = c1_nodes + c2 + q_b

    return kernel


# ----------------------------------------------------------------------------
# Host-side helpers (run once at build time)
# ----------------------------------------------------------------------------
def _num_tensorcores():
    """Best-effort TensorCore count per device (heuristic only)."""
    try:
        kind = jax.devices()[0].device_kind.lower()
    except Exception:
        return 1
    return 2 if any(t in kind for t in ("v7", "v4", "v5p")) else 1


def _choose_bb(B, N, *, num_cores=None, max_rows=512):
    """Graphs folded per grid step.

    Single-TC chips (v5e/v6e): collapse to ONE grid step when the batch fits
    (the grid is a serial loop there; each step costs ~0.35us overhead).
    Multi-TC chips (v7x): keep >= num_cores "parallel" steps so all cores work.
    ROWS = BB*N capped at max_rows (block-diag adjacency grows quadratically).
    """
    if num_cores is None:
        num_cores = _num_tensorcores()
    if N >= max_rows:
        return 1
    bb_cap = max(1, max_rows // N)
    if num_cores <= 1:
        bb = min(B, bb_cap)
    else:
        bb = min(bb_cap, max(1, B // num_cores))
    return max(1, min(bb, B))


def _structural_constants(N, BB):
    """Grid-invariant selector / mask tensors, precomputed on the host."""
    ROWS = BB * N
    cols = np.arange(ROWS)
    g_of = cols // N
    rep = (cols[None, :] % N == np.arange(N)[:, None]).astype(np.float32)   # (N, ROWS)
    bmask = (g_of[:, None] == g_of[None, :]).astype(np.float32)             # (ROWS, ROWS)
    sel_gn = (g_of[None, :] == np.arange(BB)[:, None]).astype(np.float32)   # (BB, ROWS)
    sel_ng = np.ascontiguousarray(sel_gn.T)                                 # (ROWS, BB)
    return (jnp.asarray(rep, dtype=jnp.bfloat16),
            jnp.asarray(bmask, dtype=jnp.float32),
            jnp.asarray(sel_ng, dtype=jnp.float32),
            jnp.asarray(sel_gn, dtype=jnp.float32))


def pack_params(params, *, reg_hidden):
    """Pack (and partially fold) the many tiny parameters, once."""
    E = params["mu_1"].shape[1]
    f32 = jnp.float32

    # out-major (torch-layout) weights for feature-major application W @ x_fm
    w_list = ([wt.T for wt, _ in params["pre"]]
              + [wt.T for wt, _ in params["post"]]
              + [params["mu2_wt"].T])
    # biases stored as COLUMNS so they broadcast over the node/lane axis
    b_list = ([params["mu_1"].reshape(E)]
              + [b.reshape(E) for _, b in params["pre"]]
              + [b.reshape(E) for _, b in params["post"]]
              + [params["mu2_b"].reshape(E)])

    if reg_hidden > 0:
        H = reg_hidden
        A = params["qreg_wt"][:E]          # (E, H)  == Wreg_a^T
        Bm = params["qreg_wt"][E:]         # (E, H)  == Wreg_b^T
        # fold q_1 / q_2 into q_reg (exact up to f32 reassociation)
        W1k = A.T @ params["q1_wt"].T      # (H, E)
        W2k = Bm.T @ params["q2_wt"].T     # (H, E)
        b_fold = (params["q1_b"].reshape(E) @ A
                  + params["q2_b"].reshape(E) @ Bm
                  + params["qreg_b"].reshape(H))                  # (H,)
        q_w = params["q_wt"].reshape(H)
        q_b = params["q_b"].reshape(())
        r_w = jnp.concatenate([W1k, W2k], axis=0).astype(f32)     # (2H, E)
        r_v = jnp.stack([b_fold, q_w, jnp.full((H,), q_b)],
                        axis=1).astype(f32)                       # (H, 3)
    else:
        w_list += [params["q1_wt"].T, params["q2_wt"].T]
        b_list += [params["q1_b"].reshape(E), params["q2_b"].reshape(E)]
        q_wa = params["q_wt"][:E].reshape(E)
        q_wb = params["q_wt"][E:].reshape(E)
        q_b = params["q_b"].reshape(())
        r_w = None
        r_v = jnp.stack([q_wa, q_wb, jnp.full((E,), q_b)],
                        axis=1).astype(f32)                       # (E, 3)

    w_stack = jnp.stack(w_list, axis=0).astype(f32)               # (K, E, E)
    b_cols = jnp.stack(b_list, axis=1).astype(f32)                # (E, NB)
    return {"w": w_stack, "b": b_cols, "rw": r_w, "rv": r_v}


# ----------------------------------------------------------------------------
# Forward builder: packs params once, returns a jitted callable
# ----------------------------------------------------------------------------
def make_s2v_forward(params, *, T, reg_hidden, B, N, block_graphs=None):
    E = params["mu_1"].shape[1]
    n_pre = len(params["pre"])
    n_post = len(params["post"])
    H = reg_hidden if reg_hidden > 0 else 0

    BB = block_graphs if block_graphs is not None else _choose_bb(B, N)
    BB = max(1, min(BB, B))
    G = -(-B // BB)                       # grid length
    B_pad = G * BB
    ROWS = BB * N

    packed = pack_params(params, reg_hidden=reg_hidden)
    rep, bmask, sel_ng, sel_gn = _structural_constants(N, BB)
    kernel = make_s2v_kernel(T, n_pre, n_post, reg_hidden, N, E, BB, H)

    in_specs = [
        pl.BlockSpec((1, 1, ROWS), lambda g: (g, 0, 0)),          # xv (lane-dense row)
        pl.BlockSpec((1, ROWS, N), lambda g: (g, 0, 0)),          # adj^T folded (bf16)
        pl.BlockSpec(rep.shape, lambda g: (0, 0)),                # column-replication
        pl.BlockSpec(bmask.shape, lambda g: (0, 0)),              # block-diag mask
        pl.BlockSpec(sel_ng.shape, lambda g: (0, 0)),             # node -> graph selector
        pl.BlockSpec(sel_gn.shape, lambda g: (0, 0)),             # graph -> node selector
        pl.BlockSpec(packed["w"].shape, lambda g: (0, 0, 0)),     # weight stack
        pl.BlockSpec(packed["b"].shape, lambda g: (0, 0)),        # bias columns
    ]
    const_inputs = [rep, bmask, sel_ng, sel_gn, packed["w"], packed["b"]]
    if reg_hidden > 0:
        in_specs.append(pl.BlockSpec(packed["rw"].shape, lambda g: (0, 0)))
        const_inputs.append(packed["rw"])
    in_specs.append(pl.BlockSpec(packed["rv"].shape, lambda g: (0, 0)))
    const_inputs.append(packed["rv"])

    pcall = pl.pallas_call(
        kernel,
        out_shape=jax.ShapeDtypeStruct((G, 1, ROWS), jnp.float32),
        grid_spec=pltpu.PrefetchScalarGridSpec(
            num_scalar_prefetch=0,
            grid=(G,),
            in_specs=in_specs,
            out_specs=pl.BlockSpec((1, 1, ROWS), lambda g: (g, 0, 0)),
        ),
        compiler_params=pltpu.CompilerParams(
            dimension_semantics=("parallel",),
            vmem_limit_bytes=32 * 1024 * 1024,
        ),
    )

    @jax.jit
    def forward(xv, adj):
        xv = xv.astype(jnp.float32)
        adj = adj.astype(jnp.float32)
        if B_pad != B:                    # pad batch; padded graphs are discarded
            xv = jnp.concatenate(
                [xv, jnp.zeros((B_pad - B, N, 1), jnp.float32)], 0)
            adj = jnp.concatenate(
                [adj, jnp.zeros((B_pad - B, N, N), jnp.float32)], 0)
        # lane-dense xv row per grid step; transposed adjacency folded per step,
        # shipped as bf16 (exact for 0/1 adjacency).
        xv_in = xv.reshape(G, 1, ROWS)
        adjT_in = jnp.swapaxes(adj, 1, 2).reshape(G, ROWS, N).astype(jnp.bfloat16)
        out = pcall(xv_in, adjT_in, *const_inputs)
        # (G, 1, BB*N) lane-dense slab  ->  (B, N, 1)
        return out.reshape(B_pad, N)[:B, :, None]

    return forward


# ----------------------------------------------------------------------------
# Pure-JAX reference (mirrors the PyTorch forward exactly)
# ----------------------------------------------------------------------------
def s2v_qn_reference(xv, adj, params, *, T, reg_hidden):
    xvmu1 = jnp.maximum(jnp.einsum("bni,ie->bne", xv, params["mu_1"]), 0.0)
    mu = xvmu1
    for _ in range(1, T):
        m = mu
        for (wt, b) in params["pre"]:
            m = jnp.maximum(m @ wt + b, 0.0)
        mu_pool = jnp.einsum("bnm,bme->bne", adj, m)
        for (wt, b) in params["post"]:
            mu_pool = jnp.maximum(mu_pool @ wt + b, 0.0)
        mu2 = mu_pool @ params["mu2_wt"] + params["mu2_b"]
        mu = jnp.maximum(xvmu1 + mu2, 0.0)
    pooled = jnp.einsum("bni,bne->bie", xv, mu)              # (B,1,E)
    q1 = pooled @ params["q1_wt"] + params["q1_b"]
    q1 = jnp.broadcast_to(q1, mu.shape)
    q2 = mu @ params["q2_wt"] + params["q2_b"]
    qcat = jnp.concatenate([q1, q2], axis=-1)
    if reg_hidden > 0:
        qreg = jnp.maximum(qcat @ params["qreg_wt"] + params["qreg_b"], 0.0)
        return qreg @ params["q_wt"] + params["q_b"]
    return jnp.maximum(qcat, 0.0) @ params["q_wt"] + params["q_b"]


# ----------------------------------------------------------------------------
# Deterministic parameter init (weights ~ N(0, 0.01), stored transposed (in,out))
# ----------------------------------------------------------------------------
def init_params(key, E, reg_hidden, n_pre, n_post):
    keys = iter(jax.random.split(key, 64))
    nrm = lambda shape: (0.01 * jax.random.normal(next(keys), shape)).astype(jnp.float32)
    p = {}
    p["mu_1"] = nrm((1, E))
    p["pre"] = [(nrm((E, E)), nrm((1, E))) for _ in range(n_pre)]
    p["post"] = [(nrm((E, E)), nrm((1, E))) for _ in range(n_post)]
    p["mu2_wt"], p["mu2_b"] = nrm((E, E)), nrm((1, E))
    p["q1_wt"], p["q1_b"] = nrm((E, E)), nrm((1, E))
    p["q2_wt"], p["q2_b"] = nrm((E, E)), nrm((1, E))
    if reg_hidden > 0:
        p["qreg_wt"], p["qreg_b"] = nrm((2 * E, reg_hidden)), nrm((1, reg_hidden))
        p["q_wt"], p["q_b"] = nrm((reg_hidden, 1)), nrm((1, 1))
    else:
        p["q_wt"], p["q_b"] = nrm((2 * E, 1)), nrm((1, 1))
    return p


if __name__ == "__main__":
    # 32 graphs of 8 nodes.  Single-TC chips (v5e/v6e): BB=32 -> one 256-row
    # grid step.  2-TC chips (v7x): BB=16 -> two parallel 128-row steps.
    B, N, E = 32, 8, 32
    T, reg_hidden, n_pre, n_post = 4, 16, 1, 1

    key = jax.random.PRNGKey(0)
    k_xv, k_adj, k_p, k_p0 = jax.random.split(key, 4)

    xv = jax.random.bernoulli(k_xv, 0.5, (B, N, 1)).astype(jnp.float32)
    adj = jax.random.bernoulli(k_adj, 0.4, (B, N, N)).astype(jnp.float32)
    adj = jnp.maximum(adj, jnp.swapaxes(adj, 1, 2))  # symmetric 0/1 adjacency

    # reg_hidden > 0 path (params packed once; forward is jitted)
    params = init_params(k_p, E, reg_hidden, n_pre, n_post)
    fwd = make_s2v_forward(params, T=T, reg_hidden=reg_hidden, B=B, N=N)
    out = jax.block_until_ready(fwd(xv, adj))
    out = jax.block_until_ready(fwd(xv, adj))   # second call: cached jit path
    ref = s2v_qn_reference(xv, adj, params, T=T, reg_hidden=reg_hidden)
    assert out.shape == (B, N, 1)
    assert jnp.allclose(out, ref, atol=1e-5, rtol=1e-4), "mismatch (reg_hidden>0)"

    # reg_hidden == 0 readout branch
    params0 = init_params(k_p0, E, 0, n_pre, n_post)
    fwd0 = make_s2v_forward(params0, T=T, reg_hidden=0, B=B, N=N)
    out0 = jax.block_until_ready(fwd0(xv, adj))
    ref0 = s2v_qn_reference(xv, adj, params0, T=T, reg_hidden=0)
    assert jnp.allclose(out0, ref0, atol=1e-5, rtol=1e-4), "mismatch (reg_hidden=0)"

    print("KERNEL_OK")
</pallas_src>

<mosaic_0001>
module attributes {stable_mosaic.version = 11 : i64} {
  func.func @kernel(%arg0: i32, %arg1: memref<1x1x256xf32, #tpu.memory_space<vmem>>, %arg2: memref<1x256x8xbf16, #tpu.memory_space<vmem>>, %arg3: memref<8x256xbf16, #tpu.memory_space<vmem>>, %arg4: memref<256x256xf32, #tpu.memory_space<vmem>>, %arg5: memref<256x32xf32, #tpu.memory_space<vmem>>, %arg6: memref<32x256xf32, #tpu.memory_space<vmem>>, %arg7: memref<3x32x32xf32, #tpu.memory_space<vmem>>, %arg8: memref<32x4xf32, #tpu.memory_space<vmem>>, %arg9: memref<32x32xf32, #tpu.memory_space<vmem>>, %arg10: memref<16x3xf32, #tpu.memory_space<vmem>>, %arg11: memref<1x1x256xf32, #tpu.memory_space<vmem>>) attributes {dimension_semantics = [#tpu.dimension_semantics<parallel>], iteration_bounds = array<i64: 1>, scalar_prefetch = 0 : i64, scratch_operands = 0 : i64, tpu.core_type = #tpu.core_type<tc>, window_params = [{transform_indices = @transform_0, window_bounds = array<i64: 1, 1, 256>}, {transform_indices = @transform_1, window_bounds = array<i64: 1, 256, 8>}, {pipeline_mode = #tpu.pipeline_mode<synchronous>, transform_indices = @transform_2, window_bounds = array<i64: 8, 256>}, {pipeline_mode = #tpu.pipeline_mode<synchronous>, transform_indices = @transform_3, window_bounds = array<i64: 256, 256>}, {pipeline_mode = #tpu.pipeline_mode<synchronous>, transform_indices = @transform_4, window_bounds = array<i64: 256, 32>}, {pipeline_mode = #tpu.pipeline_mode<synchronous>, transform_indices = @transform_5, window_bounds = array<i64: 32, 256>}, {pipeline_mode = #tpu.pipeline_mode<synchronous>, transform_indices = @transform_6, window_bounds = array<i64: 3, 32, 32>}, {pipeline_mode = #tpu.pipeline_mode<synchronous>, transform_indices = @transform_7, window_bounds = array<i64: 32, 4>}, {pipeline_mode = #tpu.pipeline_mode<synchronous>, transform_indices = @transform_8, window_bounds = array<i64: 32, 32>}, {pipeline_mode = #tpu.pipeline_mode<synchronous>, transform_indices = @transform_9, window_bounds = array<i64: 16, 3>}, {transform_indices = @transform_10, window_bounds = array<i64: 1, 1, 256>}]} {
    %c0 = arith.constant 0 : index
    %c0_0 = arith.constant 0 : index
    %c0_1 = arith.constant 0 : index
    %0 = vector.load %arg1[%c0, %c0_0, %c0_1] : memref<1x1x256xf32, #tpu.memory_space<vmem>>, vector<1x1x256xf32>
    %1 = vector.shape_cast %0 : vector<1x1x256xf32> to vector<1x256xf32>
    %c0_2 = arith.constant 0 : index
    %c0_3 = arith.constant 0 : index
    %c0_4 = arith.constant 0 : index
    %2 = vector.load %arg2[%c0_2, %c0_3, %c0_4] : memref<1x256x8xbf16, #tpu.memory_space<vmem>>, vector<1x256x8xbf16>
    %3 = vector.shape_cast %2 : vector<1x256x8xbf16> to vector<256x8xbf16>
    %c0_5 = arith.constant 0 : index
    %c0_6 = arith.constant 0 : index
    %4 = vector.load %arg3[%c0_5, %c0_6] : memref<8x256xbf16, #tpu.memory_space<vmem>>, vector<8x256xbf16>
    %cst = arith.constant dense<0.000000e+00> : vector<256x256xf32>
    %5 = tpu.matmul %3, %4, %cst {dimension_numbers = #tpu.dot_dimension_numbers<[1], [0], [0], [1], [0, 0, 1, 1], [], []>} : vector<256x8xbf16>, vector<8x256xbf16>, vector<256x256xf32> -> vector<256x256xf32>
    %c0_7 = arith.constant 0 : index
    %c0_8 = arith.constant 0 : index
    %6 = vector.load %arg4[%c0_7, %c0_8] : memref<256x256xf32, #tpu.memory_space<vmem>>, vector<256x256xf32>
    %7 = arith.mulf %5, %6 : vector<256x256xf32>
    %c0_9 = arith.constant 0 : index
    %c0_10 = arith.constant 0 : index
    %8 = vector.load %arg8[%c0_9, %c0_10] : memref<32x4xf32, #tpu.memory_space<vmem>>, vector<32x1xf32>
    %c0_11 = arith.constant 0 : index
    %c0_12 = arith.constant 0 : index
    %c0_13 = arith.constant 0 : index
    %9 = vector.load %arg7[%c0_11, %c0_12, %c0_13] : memref<3x32x32xf32, #tpu.memory_space<vmem>>, vector<1x32x32xf32>
    %10 = vector.shape_cast %9 : vector<1x32x32xf32> to vector<32x32xf32>
    %c1 = arith.constant 1 : index
    %c0_14 = arith.constant 0 : index
    %c0_15 = arith.constant 0 : index
    %11 = vector.load %arg7[%c1, %c0_14, %c0_15] : memref<3x32x32xf32, #tpu.memory_space<vmem>>, vector<1x32x32xf32>
    %12 = vector.shape_cast %11 : vector<1x32x32xf32> to vector<32x32xf32>
    %c2 = arith.constant 2 : index
    %c0_16 = arith.constant 0 : index
    %c0_17 = arith.constant 0 : index
    %13 = vector.load %arg7[%c2, %c0_16, %c0_17] : memref<3x32x32xf32, #tpu.memory_space<vmem>>, vector<1x32x32xf32>
    %14 = vector.shape_cast %13 : vector<1x32x32xf32> to vector<32x32xf32>
    %c0_18 = arith.constant 0 : index
    %c1_19 = arith.constant 1 : index
    %15 = vector.load %arg8[%c0_18, %c1_19] : memref<32x4xf32, #tpu.memory_space<vmem>>, vector<32x1xf32>
    %c0_20 = arith.constant 0 : index
    %c2_21 = arith.constant 2 : index
    %16 = vector.load %arg8[%c0_20, %c2_21] : memref<32x4xf32, #tpu.memory_space<vmem>>, vector<32x1xf32>
    %c0_22 = arith.constant 0 : index
    %c3 = arith.constant 3 : index
    %17 = vector.load %arg8[%c0_22, %c3] : memref<32x4xf32, #tpu.memory_space<vmem>>, vector<32x1xf32>
    %18 = vector.shape_cast %15 : vector<32x1xf32> to vector<32x1xf32>
    %19 = vector.broadcast %18 : vector<32x1xf32> to vector<32x256xf32>
    %20 = vector.shape_cast %16 : vector<32x1xf32> to vector<32x1xf32>
    %21 = vector.broadcast %20 : vector<32x1xf32> to vector<32x256xf32>
    %22 = vector.shape_cast %17 : vector<32x1xf32> to vector<32x1xf32>
    %23 = vector.broadcast %22 : vector<32x1xf32> to vector<32x256xf32>
    %24 = vector.broadcast %8 : vector<32x1xf32> to vector<32x256xf32>
    %25 = vector.broadcast %1 : vector<1x256xf32> to vector<32x256xf32>
    %26 = arith.mulf %24, %25 : vector<32x256xf32>
    %cst_23 = arith.constant 0.000000e+00 : f32
    %27 = vector.broadcast %cst_23 : f32 to vector<32x256xf32>
    %28 = arith.maximumf %26, %27 : vector<32x256xf32>
    %cst_24 = arith.constant dense<0.000000e+00> : vector<32x256xf32>
    %29 = tpu.matmul %10, %28, %cst_24 {dimension_numbers = #tpu.dot_dimension_numbers<[1], [0], [0], [1], [0, 0, 1, 1], [], []>} : vector<32x32xf32>, vector<32x256xf32>, vector<32x256xf32> -> vector<32x256xf32>
    %30 = arith.addf %29, %19 : vector<32x256xf32>
    %cst_25 = arith.constant 0.000000e+00 : f32
    %31 = vector.broadcast %cst_25 : f32 to vector<32x256xf32>
    %32 = arith.maximumf %30, %31 : vector<32x256xf32>
    %cst_26 = arith.constant dense<0.000000e+00> : vector<32x256xf32>
    %33 = tpu.matmul %32, %7, %cst_26 {dimension_numbers = #tpu.dot_dimension_numbers<[1], [0], [0], [1], [0, 0, 1, 1], [], []>} : vector<32x256xf32>, vector<256x256xf32>, vector<32x256xf32> -> vector<32x256xf32>
    %cst_27 = arith.constant dense<0.000000e+00> : vector<32x256xf32>
    %34 = tpu.matmul %12, %33, %cst_27 {dimension_numbers = #tpu.dot_dimension_numbers<[1], [0], [0], [1], [0, 0, 1, 1], [], []>} : vector<32x32xf32>, vector<32x256xf32>, vector<32x256xf32> -> vector<32x256xf32>
    %35 = arith.addf %34, %21 : vector<32x256xf32>
    %cst_28 = arith.constant 0.000000e+00 : f32
    %36 = vector.broadcast %cst_28 : f32 to vector<32x256xf32>
    %37 = arith.maximumf %35, %36 : vector<32x256xf32>
    %cst_29 = arith.constant dense<0.000000e+00> : vector<32x256xf32>
    %38 = tpu.matmul %14, %37, %cst_29 {dimension_numbers = #tpu.dot_dimension_numbers<[1], [0], [0], [1], [0, 0, 1, 1], [], []>} : vector<32x32xf32>, vector<32x256xf32>, vector<32x256xf32> -> vector<32x256xf32>
    %39 = arith.addf %38, %23 : vector<32x256xf32>
    %40 = arith.addf %28, %39 : vector<32x256xf32>
    %cst_30 = arith.constant 0.000000e+00 : f32
    %41 = vector.broadcast %cst_30 : f32 to vector<32x256xf32>
    %42 = arith.maximumf %40, %41 : vector<32x256xf32>
    %cst_31 = arith.constant dense<0.000000e+00> : vector<32x256xf32>
    %43 = tpu.matmul %10, %42, %cst_31 {dimension_numbers = #tpu.dot_dimension_numbers<[1], [0], [0], [1], [0, 0, 1, 1], [], []>} : vector<32x32xf32>, vector<32x256xf32>, vector<32x256xf32> -> vector<32x256xf32>
    %44 = arith.addf %43, %19 : vector<32x256xf32>
    %cst_32 = arith.constant 0.000000e+00 : f32
    %45 = vector.broadcast %cst_32 : f32 to vector<32x256xf32>
    %46 = arith.maximumf %44, %45 : vector<32x256xf32>
    %cst_33 = arith.constant dense<0.000000e+00> : vector<32x256xf32>
    %47 = tpu.matmul %46, %7, %cst_33 {dimension_numbers = #tpu.dot_dimension_numbers<[1], [0], [0], [1], [0, 0, 1, 1], [], []>} : vector<32x256xf32>, vector<256x256xf32>, vector<32x256xf32> -> vector<32x256xf32>
    %cst_34 = arith.constant dense<0.000000e+00> : vector<32x256xf32>
    %48 = tpu.matmul %12, %47, %cst_34 {dimension_numbers = #tpu.dot_dimension_numbers<[1], [0], [0], [1], [0, 0, 1, 1], [], []>} : vector<32x32xf32>, vector<32x256xf32>, vector<32x256xf32> -> vector<32x256xf32>
    %49 = arith.addf %48, %21 : vector<32x256xf32>
    %cst_35 = arith.constant 0.000000e+00 : f32
    %50 = vector.broadcast %cst_35 : f32 to vector<32x256xf32>
    %51 = arith.maximumf %49, %50 : vector<32x256xf32>
    %cst_36 = arith.constant dense<0.000000e+00> : vector<32x256xf32>
    %52 = tpu.matmul %14, %51, %cst_36 {dimension_numbers = #tpu.dot_dimension_numbers<[1], [0], [0], [1], [0, 0, 1, 1], [], []>} : vector<32x32xf32>, vector<32x256xf32>, vector<32x256xf32> -> vector<32x256xf32>
    %53 = arith.addf %52, %23 : vector<32x256xf32>
    %54 = arith.addf %28, %53 : vector<32x256xf32>
    %cst_37 = arith.constant 0.000000e+00 : f32
    %55 = vector.broadcast %cst_37 : f32 to vector<32x256xf32>
    %56 = arith.maximumf %54, %55 : vector<32x256xf32>
    %cst_38 = arith.constant dense<0.000000e+00> : vector<32x256xf32>
    %57 = tpu.matmul %10, %56, %cst_38 {dimension_numbers = #tpu.dot_dimension_numbers<[1], [0], [0], [1], [0, 0, 1, 1], [], []>} : vector<32x32xf32>, vector<32x256xf32>, vector<32x256xf32> -> vector<32x256xf32>
    %58 = arith.addf %57, %19 : vector<32x256xf32>
    %cst_39 = arith.constant 0.000000e+00 : f32
    %59 = vector.broadcast %cst_39 : f32 to vector<32x256xf32>
    %60 = arith.maximumf %58, %59 : vector<32x256xf32>
    %cst_40 = arith.constant dense<0.000000e+00> : vector<32x256xf32>
    %61 = tpu.matmul %60, %7, %cst_40 {dimension_numbers = #tpu.dot_dimension_numbers<[1], [0], [0], [1], [0, 0, 1, 1], [], []>} : vector<32x256xf32>, vector<256x256xf32>, vector<32x256xf32> -> vector<32x256xf32>
    %cst_41 = arith.constant dense<0.000000e+00> : vector<32x256xf32>
    %62 = tpu.matmul %12, %61, %cst_41 {dimension_numbers = #tpu.dot_dimension_numbers<[1], [0], [0], [1], [0, 0, 1, 1], [], []>} : vector<32x32xf32>, vector<32x256xf32>, vector<32x256xf32> -> vector<32x256xf32>
    %63 = arith.addf %62, %21 : vector<32x256xf32>
    %cst_42 = arith.constant 0.000000e+00 : f32
    %64 = vector.broadcast %cst_42 : f32 to vector<32x256xf32>
    %65 = arith.maximumf %63, %64 : vector<32x256xf32>
    %cst_43 = arith.constant dense<0.000000e+00> : vector<32x256xf32>
    %66 = tpu.matmul %14, %65, %cst_43 {dimension_numbers = #tpu.dot_dimension_numbers<[1], [0], [0], [1], [0, 0, 1, 1], [], []>} : vector<32x32xf32>, vector<32x256xf32>, vector<32x256xf32> -> vector<32x256xf32>
    %67 = arith.addf %66, %23 : vector<32x256xf32>
    %68 = arith.addf %28, %67 : vector<32x256xf32>
    %cst_44 = arith.constant 0.000000e+00 : f32
    %69 = vector.broadcast %cst_44 : f32 to vector<32x256xf32>
    %70 = arith.maximumf %68, %69 : vector<32x256xf32>
    %71 = vector.broadcast %1 : vector<1x256xf32> to vector<32x256xf32>
    %72 = arith.mulf %70, %71 : vector<32x256xf32>
    %c0_45 = arith.constant 0 : index
    %c0_46 = arith.constant 0 : index
    %73 = vector.load %arg5[%c0_45, %c0_46] : memref<256x32xf32, #tpu.memory_space<vmem>>, vector<256x32xf32>
    %cst_47 = arith.constant dense<0.000000e+00> : vector<32x32xf32>
    %74 = tpu.matmul %72, %73, %cst_47 {dimension_numbers = #tpu.dot_dimension_numbers<[1], [0], [0], [1], [0, 0, 1, 1], [], []>} : vector<32x256xf32>, vector<256x32xf32>, vector<32x32xf32> -> vector<32x32xf32>
    %c0_48 = arith.constant 0 : index
    %c0_49 = arith.constant 0 : index
    %75 = vector.load %arg9[%c0_48, %c0_49] : memref<32x32xf32, #tpu.memory_space<vmem>>, vector<16x32xf32>
    %c16 = arith.constant 16 : index
    %c0_50 = arith.constant 0 : index
    %76 = vector.load %arg9[%c16, %c0_50] : memref<32x32xf32, #tpu.memory_space<vmem>>, vector<16x32xf32>
    %c0_51 = arith.constant 0 : index
    %c0_52 = arith.constant 0 : index
    %77 = vector.load %arg10[%c0_51, %c0_52] : memref<16x3xf32, #tpu.memory_space<vmem>>, vector<16x1xf32>
    %c0_53 = arith.constant 0 : index
    %c1_54 = arith.constant 1 : index
    %78 = vector.load %arg10[%c0_53, %c1_54] : memref<16x3xf32, #tpu.memory_space<vmem>>, vector<16x1xf32>
    %c0_55 = arith.constant 0 : index
    %c2_56 = arith.constant 2 : index
    %79 = vector.load %arg10[%c0_55, %c2_56] : memref<16x3xf32, #tpu.memory_space<vmem>>, vector<1x1xf32>
    %cst_57 = arith.constant dense<0.000000e+00> : vector<16x32xf32>
    %80 = tpu.matmul %75, %74, %cst_57 {dimension_numbers = #tpu.dot_dimension_numbers<[1], [0], [0], [1], [0, 0, 1, 1], [], []>} : vector<16x32xf32>, vector<32x32xf32>, vector<16x32xf32> -> vector<16x32xf32>
    %81 = vector.broadcast %77 : vector<16x1xf32> to vector<16x32xf32>
    %82 = arith.addf %80, %81 : vector<16x32xf32>
    %c0_58 = arith.constant 0 : index
    %c0_59 = arith.constant 0 : index
    %83 = vector.load %arg6[%c0_58, %c0_59] : memref<32x256xf32, #tpu.memory_space<vmem>>, vector<32x256xf32>
    %cst_60 = arith.constant dense<0.000000e+00> : vector<16x256xf32>
    %84 = tpu.matmul %82, %83, %cst_60 {dimension_numbers = #tpu.dot_dimension_numbers<[1], [0], [0], [1], [0, 0, 1, 1], [], []>} : vector<16x32xf32>, vector<32x256xf32>, vector<16x256xf32> -> vector<16x256xf32>
    %cst_61 = arith.constant dense<0.000000e+00> : vector<16x256xf32>
    %85 = tpu.matmul %76, %70, %cst_61 {dimension_numbers = #tpu.dot_dimension_numbers<[1], [0], [0], [1], [0, 0, 1, 1], [], []>} : vector<16x32xf32>, vector<32x256xf32>, vector<16x256xf32> -> vector<16x256xf32>
    %86 = arith.addf %84, %85 : vector<16x256xf32>
    %cst_62 = arith.constant 0.000000e+00 : f32
    %87 = vector.broadcast %cst_62 : f32 to vector<16x256xf32>
    %88 = arith.maximumf %86, %87 : vector<16x256xf32>
    %89 = vector.broadcast %78 : vector<16x1xf32> to vector<16x256xf32>
    %90 = arith.mulf %89, %88 : vector<16x256xf32>
    %cst_63 = arith.constant dense<0.000000e+00> : vector<256xf32>
    %91 = vector.multi_reduction <add>, %90, %cst_63 [0] : vector<16x256xf32> to vector<256xf32>
    %92 = vector.shape_cast %91 : vector<256xf32> to vector<1x256xf32>
    %93 = vector.broadcast %79 : vector<1x1xf32> to vector<1x256xf32>
    %94 = arith.addf %92, %93 : vector<1x256xf32>
    %c0_64 = arith.constant 0 : index
    %c0_65 = arith.constant 0 : index
    %c0_66 = arith.constant 0 : index
    %95 = vector.load %arg11[%c0_64, %c0_65, %c0_66] : memref<1x1x256xf32, #tpu.memory_space<vmem>>, vector<1x1x256xf32>
    %96 = vector.shape_cast %95 : vector<1x1x256xf32> to vector<1x256xf32>
    %97 = vector.shape_cast %94 : vector<1x256xf32> to vector<1x1x256xf32>
    tpu.vector_store %arg11[%c0_64, %c0_65, %c0_66], %97 {strides = array<i32>} : memref<1x1x256xf32, #tpu.memory_space<vmem>>, vector<1x1x256xf32>,
    return
  }
  func.func @transform_0(%arg0: i32) -> (i32, i32, i32) {
    %c0_i32 = arith.constant 0 : i32
    %c0_i32_0 = arith.constant 0 : i32
    %c0_i32_1 = arith.constant 0 : i32
    return %arg0, %c0_i32, %c0_i32_0 : i32, i32, i32
  }
  func.func @transform_1(%arg0: i32) -> (i32, i32, i32) {
    %c0_i32 = arith.constant 0 : i32
    %c0_i32_0 = arith.constant 0 : i32
    %c0_i32_1 = arith.constant 0 : i32
    return %arg0, %c0_i32, %c0_i32_0 : i32, i32, i32
  }
  func.func @transform_2(%arg0: i32) -> (i32, i32) {
    %c0_i32 = arith.constant 0 : i32
    %c0_i32_0 = arith.constant 0 : i32
    %c0_i32_1 = arith.constant 0 : i32
    return %c0_i32, %c0_i32_0 : i32, i32
  }
  func.func @transform_3(%arg0: i32) -> (i32, i32) {
    %c0_i32 = arith.constant 0 : i32
    %c0_i32_0 = arith.constant 0 : i32
    %c0_i32_1 = arith.constant 0 : i32
    return %c0_i32, %c0_i32_0 : i32, i32
  }
  func.func @transform_4(%arg0: i32) -> (i32, i32) {
    %c0_i32 = arith.constant 0 : i32
    %c0_i32_0 = arith.constant 0 : i32
    %c0_i32_1 = arith.constant 0 : i32
    return %c0_i32, %c0_i32_0 : i32, i32
  }
  func.func @transform_5(%arg0: i32) -> (i32, i32) {
    %c0_i32 = arith.constant 0 : i32
    %c0_i32_0 = arith.constant 0 : i32
    %c0_i32_1 = arith.constant 0 : i32
    return %c0_i32, %c0_i32_0 : i32, i32
  }
  func.func @transform_6(%arg0: i32) -> (i32, i32, i32) {
    %c0_i32 = arith.constant 0 : i32
    %c0_i32_0 = arith.constant 0 : i32
    %c0_i32_1 = arith.constant 0 : i32
    %c0_i32_2 = arith.constant 0 : i32
    return %c0_i32, %c0_i32_0, %c0_i32_1 : i32, i32, i32
  }
  func.func @transform_7(%arg0: i32) -> (i32, i32) {
    %c0_i32 = arith.constant 0 : i32
    %c0_i32_0 = arith.constant 0 : i32
    %c0_i32_1 = arith.constant 0 : i32
    return %c0_i32, %c0_i32_0 : i32, i32
  }
  func.func @transform_8(%arg0: i32) -> (i32, i32) {
    %c0_i32 = arith.constant 0 : i32
    %c0_i32_0 = arith.constant 0 : i32
    %c0_i32_1 = arith.constant 0 : i32
    return %c0_i32, %c0_i32_0 : i32, i32
  }
  func.func @transform_9(%arg0: i32) -> (i32, i32) {
    %c0_i32 = arith.constant 0 : i32
    %c0_i32_0 = arith.constant 0 : i32
    %c0_i32_1 = arith.constant 0 : i32
    return %c0_i32, %c0_i32_0 : i32, i32
  }
  func.func @transform_10(%arg0: i32) -> (i32, i32, i32) {
    %c0_i32 = arith.constant 0 : i32
    %c0_i32_0 = arith.constant 0 : i32
    %c0_i32_1 = arith.constant 0 : i32
    return %arg0, %c0_i32, %c0_i32_0 : i32, i32, i32
  }
}

</mosaic_0001>

<llo_original>
// kernel: forward.1
$region0: #{forward.1}
  #allocation0 [shape = 'u32[]', space=smem, size = 0x4, offset = 0x4, fixed_abs, tag = 'smem constant byte address 0x4 - core index']
  #allocation1 [shape = 'u32[144,128]{1,0:T(1,128)}', space=vmem, size = 0x12000, scoped, tag = 'internal scratch']
  %s0 = inlined_call_operand.vmem [shape: f32[1,1,256], index: 0, kind: input, shape index: {}]
  %s1 = inlined_call_operand.vmem [shape: bf16[1,256,8], index: 1, kind: input, shape index: {}]
  %s2 = inlined_call_operand.hbm [shape: bf16[8,256], index: 2, kind: input, shape index: {}]
  %s3 = inlined_call_operand.hbm [shape: f32[256,256], index: 3, kind: input, shape index: {}]
  %s4 = inlined_call_operand.vmem [shape: f32[256,32], index: 4, kind: input, shape index: {}]
  %s5 = inlined_call_operand.hbm [shape: f32[32,256], index: 5, kind: input, shape index: {}]
  %s6 = inlined_call_operand.vmem [shape: f32[3,32,32], index: 6, kind: input, shape index: {}]
  %s7 = inlined_call_operand.hbm [shape: f32[32,4], index: 7, kind: input, shape index: {}]
  %s8 = inlined_call_operand.hbm [shape: f32[32,32], index: 8, kind: input, shape index: {}]
  %s9 = inlined_call_operand.vmem [shape: f32[16,3], index: 9, kind: input, shape index: {}]
  %s10 = inlined_call_operand.vmem [shape: f32[1,1,256], index: 10, kind: output, shape index: {}]
  %s11 = sld [smem:[#allocation0]]
  $region70: #{forward.1} parent=0
    _
  %s13 = ssub.s32 1, %s11
  %s14 = scalar_select 0, %s13, %s11
  $region1: #{forward.1} parent=0
    #allocation2 [shape = 'u8[4096]{0}', space=vmem, size = 0x1000, scoped, tag = 'input window, operand 2, single buffered']
    #allocation3 [shape = 's32[1]{0}', space=sflag, size = 0x4, scoped, tag = 'scoped memory for forward.1']
    #allocation4 [shape = 'u8[262144]{0}', space=vmem, size = 0x40000, scoped, tag = 'input window, operand 3, single buffered']
    #allocation5 [shape = 's32[1]{0}', space=sflag, size = 0x4, scoped, tag = 'scoped memory for forward.1']
    #allocation6 [shape = 'u8[32768]{0}', space=vmem, size = 0x8000, scoped, tag = 'input window, operand 5, single buffered']
    #allocation7 [shape = 'u8[16384]{0}', space=vmem, size = 0x4000, scoped, tag = 'input window, operand 7, single buffered']
    #allocation8 [shape = 's32[1]{0}', space=sflag, size = 0x4, scoped, tag = 'scoped memory for forward.1']
    #allocation9 [shape = 'u8[16384]{0}', space=vmem, size = 0x4000, scoped, tag = 'input window, operand 8, single buffered']
    %15 = vsyncpa [#allocation3], 0
    %16 = vsyncpa [#allocation5], 0
    %17 = vsyncpa [#allocation8], 0
    // Predicated region
    $region2: #{forward.1} parent=1 // pred_check
      _
    $region3: #{forward.1} parent=1 // pred_check_branch
      %19 = sbr.rel (0) target = $region5
    $region4: #{forward.1} parent=1 // pred_region
      _
    $region5: #{forward.1} parent=1 // pred_fallthru
      _
    // Predicated region
    $region6: #{forward.1} parent=1 // pred_check
      _
    $region7: #{forward.1} parent=1 // pred_check_branch
      %21 = sbr.rel (0) target = $region9
    $region8: #{forward.1} parent=1 // pred_region
      _
    $region9: #{forward.1} parent=1 // pred_fallthru
      _
    // Predicated region
    $region10: #{forward.1} parent=1 // pred_check
      _
    $region11: #{forward.1} parent=1 // pred_check_branch
      %23 = sbr.rel (0) target = $region13
    $region12: #{forward.1} parent=1 // pred_region
      %s25 = ssub.s32 128, 128
      %26 = vsyncadd [#allocation3], %s25
      %s28 = sshll.u32 [#allocation2], 4
      %s29 = int_to_ptr.vmem [resolvable:$true] %s28
      %31 = dma.hbm_to_vmem [thread:$0]  %s2, 128, %s29, [#allocation3]
    $region13: #{forward.1} parent=1 // pred_fallthru
      _
    // Predicated region
    $region14: #{forward.1} parent=1 // pred_check
      _
    $region15: #{forward.1} parent=1 // pred_check_branch
      %33 = sbr.rel (0) target = $region17
    $region16: #{forward.1} parent=1 // pred_region
      %s35 = ssub.s32 8192, 8192
      %36 = vsyncadd [#allocation5], %s35
      %s37 = sshll.u32 [#allocation4], 4
      %s38 = int_to_ptr.vmem [resolvable:$true] %s37
      %43 = dma.hbm_to_vmem [thread:$0]  %s3, 8192, %s38, [#allocation5], 256, 256, 16
    $region17: #{forward.1} parent=1 // pred_fallthru
      _
    // Predicated region
    $region18: #{forward.1} parent=1 // pred_check
      _
    $region19: #{forward.1} parent=1 // pred_check_branch
      %45 = sbr.rel (0) target = $region21
    $region20: #{forward.1} parent=1 // pred_region
      _
    $region21: #{forward.1} parent=1 // pred_fallthru
      _
    // Predicated region
    $region22: #{forward.1} parent=1 // pred_check
      _
    $region23: #{forward.1} parent=1 // pred_check_branch
      %47 = sbr.rel (0) target = $region25
    $region24: #{forward.1} parent=1 // pred_region
      %s49 = ssub.s32 1024, 1024
      %50 = vsyncadd [#allocation5], %s49
      %s51 = sshll.u32 [#allocation6], 4
      %s52 = int_to_ptr.vmem [resolvable:$true] %s51
      %57 = dma.hbm_to_vmem [thread:$0]  %s5, 1024, %s52, [#allocation5], 256, 256, 16
    $region25: #{forward.1} parent=1 // pred_fallthru
      _
    // Predicated region
    $region26: #{forward.1} parent=1 // pred_check
      _
    $region27: #{forward.1} parent=1 // pred_check_branch
      %59 = sbr.rel (0) target = $region29
    $region28: #{forward.1} parent=1 // pred_region
      _
    $region29: #{forward.1} parent=1 // pred_fallthru
      _
    // Predicated region
    $region30: #{forward.1} parent=1 // pred_check
      _
    $region31: #{forward.1} parent=1 // pred_check_branch
      %61 = sbr.rel (0) target = $region33
    $region32: #{forward.1} parent=1 // pred_region
      %s63 = ssub.s32 512, 512
      %64 = vsyncadd [#allocation8], %s63
      %s65 = sshll.u32 [#allocation7], 4
      %s66 = int_to_ptr.vmem [resolvable:$true] %s65
      %71 = dma.hbm_to_vmem [thread:$0]  %s7, 512, %s66, [#allocation8], 128, 128, 8
    $region33: #{forward.1} parent=1 // pred_fallthru
      _
    // Predicated region
    $region34: #{forward.1} parent=1 // pred_check
      _
    $region35: #{forward.1} parent=1 // pred_check_branch
      %73 = sbr.rel (0) target = $region37
    $region36: #{forward.1} parent=1 // pred_region
      %s75 = ssub.s32 512, 512
      %76 = vsyncadd [#allocation8], %s75
      %s77 = sshll.u32 [#allocation9], 4
      %s78 = int_to_ptr.vmem [resolvable:$true] %s77
      %83 = dma.hbm_to_vmem [thread:$0]  %s8, 512, %s78, [#allocation8], 128, 128, 8
    $region37: #{forward.1} parent=1 // pred_fallthru
      _
    // Predicated region
    $region38: #{forward.1} parent=1 // pred_check
      _
    $region39: #{forward.1} parent=1 // pred_check_branch
      %85 = sbr.rel (0) target = $region41
    $region40: #{forward.1} parent=1 // pred_region
      _
    $region41: #{forward.1} parent=1 // pred_fallthru
      _
    // Predicated region
    $region42: #{forward.1} parent=1 // pred_check
      _
    $region43: #{forward.1} parent=1 // pred_check_branch
      %87 = sbr.rel (0) target = $region45
    $region44: #{forward.1} parent=1 // pred_region
      %88 = dma.done [#allocation3], 128
    $region45: #{forward.1} parent=1 // pred_fallthru
      _
    // Predicated region
    $region46: #{forward.1} parent=1 // pred_check
      _
    $region47: #{forward.1} parent=1 // pred_check_branch
      %90 = sbr.rel (0) target = $region49
    $region48: #{forward.1} parent=1 // pred_region
      %91 = dma.done [#allocation5], 8192
    $region49: #{forward.1} parent=1 // pred_fallthru
      _
    // Predicated region
    $region50: #{forward.1} parent=1 // pred_check
      _
    $region51: #{forward.1} parent=1 // pred_check_branch
      %93 = sbr.rel (0) target = $region53
    $region52: #{forward.1} parent=1 // pred_region
      %94 = dma.done [#allocation5], 1024
    $region53: #{forward.1} parent=1 // pred_fallthru
      _
    // Predicated region
    $region54: #{forward.1} parent=1 // pred_check
      _
    $region55: #{forward.1} parent=1 // pred_check_branch
      %96 = sbr.rel (0) target = $region57
    $region56: #{forward.1} parent=1 // pred_region
      %97 = dma.done [#allocation8], 512
    $region57: #{forward.1} parent=1 // pred_fallthru
      _
    // Predicated region
    $region58: #{forward.1} parent=1 // pred_check
      _
    $region59: #{forward.1} parent=1 // pred_check_branch
      %99 = sbr.rel (0) target = $region61
    $region60: #{forward.1} parent=1 // pred_region
      %100 = dma.done [#allocation8], 512
    $region61: #{forward.1} parent=1 // pred_fallthru
      _
    %v102 = vld [vmem:[%s0] sm:$0x3]
    %v103 = vld [vmem:[%s1] sm:$0xf]
    %v104 = vld [vmem:[%s1 + $0x4] sm:$0xf]
    %v105 = vld [vmem:[%s1 + $0x8] sm:$0xf]
    %v106 = vld [vmem:[%s1 + $0xc] sm:$0xf]
    %v107 = vld [vmem:[%s1 + $0x10] sm:$0xf]
    %v108 = vld [vmem:[%s1 + $0x14] sm:$0xf]
    %v109 = vld [vmem:[%s1 + $0x18] sm:$0xf]
    %v110 = vld [vmem:[%s1 + $0x1c] sm:$0xf]
    %v111 = vld [vmem:[%s1 + $0x20] sm:$0xf]
    %v112 = vld [vmem:[%s1 + $0x24] sm:$0xf]
    %v113 = vld [vmem:[%s1 + $0x28] sm:$0xf]
    %v114 = vld [vmem:[%s1 + $0x2c] sm:$0xf]
    %v115 = vld [vmem:[%s1 + $0x30] sm:$0xf]
    %v116 = vld [vmem:[%s1 + $0x34] sm:$0xf]
    %v117 = vld [vmem:[%s1 + $0x38] sm:$0xf]
    %v118 = vld [vmem:[%s1 + $0x3c] sm:$0xf]
    %v119 = vld [vmem:[%s1 + $0x40] sm:$0xf]
    %v120 = vld [vmem:[%s1 + $0x44] sm:$0xf]
    %v121 = vld [vmem:[%s1 + $0x48] sm:$0xf]
    %v122 = vld [vmem:[%s1 + $0x4c] sm:$0xf]
    %v123 = vld [vmem:[%s1 + $0x50] sm:$0xf]
    %v124 = vld [vmem:[%s1 + $0x54] sm:$0xf]
    %v125 = vld [vmem:[%s1 + $0x58] sm:$0xf]
    %v126 = vld [vmem:[%s1 + $0x5c] sm:$0xf]
    %v127 = vld [vmem:[%s1 + $0x60] sm:$0xf]
    %v128 = vld [vmem:[%s1 + $0x64] sm:$0xf]
    %v129 = vld [vmem:[%s1 + $0x68] sm:$0xf]
    %v130 = vld [vmem:[%s1 + $0x6c] sm:$0xf]
    %v131 = vld [vmem:[%s1 + $0x70] sm:$0xf]
    %v132 = vld [vmem:[%s1 + $0x74] sm:$0xf]
    %v133 = vld [vmem:[%s1 + $0x78] sm:$0xf]
    %v134 = vld [vmem:[%s1 + $0x7c] sm:$0xf]
    %v135 = vld [vmem:[#allocation2] sm:$0xff]
    %v168 = vunpack.c.l.b16 %v103
    %v169 = vunpack.c.l.b16 %v104
    %v170 = vunpack.c.l.b16 %v105
    %v171 = vunpack.c.l.b16 %v106
    %v172 = vunpack.c.l.b16 %v107
    %v173 = vunpack.c.l.b16 %v108
    %v174 = vunpack.c.l.b16 %v109
    %v175 = vunpack.c.l.b16 %v110
    %v176 = vunpack.c.l.b16 %v111
    %v177 = vunpack.c.l.b16 %v112
    %v178 = vunpack.c.l.b16 %v113
    %v179 = vunpack.c.l.b16 %v114
    %v180 = vunpack.c.l.b16 %v115
    %v181 = vunpack.c.l.b16 %v116
    %v182 = vunpack.c.l.b16 %v117
    %v183 = vunpack.c.l.b16 %v118
    %v184 = vunpack.c.l.b16 %v119
    %v185 = vunpack.c.l.b16 %v120
    %v186 = vunpack.c.l.b16 %v121
    %v187 = vunpack.c.l.b16 %v122
    %v188 = vunpack.c.l.b16 %v123
    %v189 = vunpack.c.l.b16 %v124
    %v190 = vunpack.c.l.b16 %v125
    %v191 = vunpack.c.l.b16 %v126
    %v192 = vunpack.c.l.b16 %v127
    %v193 = vunpack.c.l.b16 %v128
    %v194 = vunpack.c.l.b16 %v129
    %v195 = vunpack.c.l.b16 %v130
    %v196 = vunpack.c.l.b16 %v131
    %v197 = vunpack.c.l.b16 %v132
    %v198 = vunpack.c.l.b16 %v133
    %v199 = vunpack.c.l.b16 %v134
    %v200 = vpack.c.b16 %v169, %v168
    %v201 = vpack.c.b16 %v171, %v170
    %v202 = vpack.c.b16 %v173, %v172
    %v203 = vpack.c.b16 %v175, %v174
    %v204 = vpack.c.b16 %v177, %v176
    %v205 = vpack.c.b16 %v179, %v178
    %v206 = vpack.c.b16 %v181, %v180
    %v207 = vpack.c.b16 %v183, %v182
    %v208 = vpack.c.b16 %v185, %v184
    %v209 = vpack.c.b16 %v187, %v186
    %v210 = vpack.c.b16 %v189, %v188
    %v211 = vpack.c.b16 %v191, %v190
    %v212 = vpack.c.b16 %v193, %v192
    %v213 = vpack.c.b16 %v195, %v194
    %v214 = vpack.c.b16 %v197, %v196
    %v215 = vpack.c.b16 %v199, %v198
    %v217 = vunpack.c.l.b16 %v135
    %v218 = vunpack.c.h.b16 %v135
    %v219 = vpack.c.b16 %v217, %v217
    %v220 = vpack.c.b16 %v218, %v218
    %vm221 = vcmask 64512
    %v223 = vsel %vm221, %v200, 0
    %v226 = vsel %vm221, %v201, 0
    %v229 = vsel %vm221, %v202, 0
    %v232 = vsel %vm221, %v203, 0
    %v235 = vsel %vm221, %v204, 0
    %v238 = vsel %vm221, %v205, 0
    %v241 = vsel %vm221, %v206, 0
    %v244 = vsel %vm221, %v207, 0
    %v247 = vsel %vm221, %v208, 0
    %v250 = vsel %vm221, %v209, 0
    %v253 = vsel %vm221, %v210, 0
    %v256 = vsel %vm221, %v211, 0
    %v259 = vsel %vm221, %v212, 0
    %v262 = vsel %vm221, %v213, 0
    %v265 = vsel %vm221, %v214, 0
    %v268 = vsel %vm221, %v215, 0
    %vm270 = vcmask 1043456
    %v272 = vsel %vm270, %v219, 0
    %v275 = vsel %vm270, %v220, 0
    %277 = vmatprep.subr.bf16.mxu0 %v275
    %278 = vmatpush1.bf16.msra.mxu0 %v272
    %279 = vmatprep.subr.bf16.mxu0 0
    %280 = vmatpush1.bf16.msra.mxu0 0
    %281 = vmatprep.subr.bf16.mxu0 0
    %282 = vmatpush1.bf16.msra.mxu0 0
    %283 = vmatprep.subr.bf16.mxu0 0
    %284 = vmatpush1.bf16.msra.mxu0 0
    %285 = vmatprep.subr.bf16.mxu0 0
    %286 = vmatpush1.bf16.msra.mxu0 0
    %287 = vmatprep.subr.bf16.mxu0 0
    %288 = vmatpush1.bf16.msra.mxu0 0
    %289 = vmatprep.subr.bf16.mxu0 0
    %290 = vmatpush1.bf16.msra.mxu0 0
    %291 = vmatprep.subr.bf16.mxu0 0
    %292 = vmatpush1.bf16.msra.mxu0 0
    %293 = vmatprep.subr.bf16.mxu0 0
    %294 = vmatpush1.bf16.msra.mxu0 0
    %295 = vmatprep.subr.bf16.mxu0 0
    %296 = vmatpush1.bf16.msra.mxu0 0
    %297 = vmatprep.subr.bf16.mxu0 0
    %298 = vmatpush1.bf16.msra.mxu0 0
    %299 = vmatprep.subr.bf16.mxu0 0
    %300 = vmatpush1.bf16.msra.mxu0 0
    %301 = vmatprep.subr.bf16.mxu0 0
    %302 = vmatpush1.bf16.msra.mxu0 0
    %303 = vmatprep.subr.bf16.mxu0 0
    %304 = vmatpush1.bf16.msra.mxu0 0
    %305 = vmatprep.subr.bf16.mxu0 0
    %306 = vmatpush1.bf16.msra.mxu0 0
    %307 = vmatprep.subr.bf16.mxu0 0
    %308 = vmatpush1.bf16.msra.mxu0 0
    %309 = vmatprep.mubr.bf16.mxu0 0
    %310 = vmatmul.mubr.bf16.gmra.mrb[0].mxu0 %v223
    %v311 = vpop.f32.mrb[0].mxu0
    %v312 = vadd.f32 0.0, %v311
    %v313 = vpop.f32.mrb[0].mxu0
    %v314 = vadd.f32 0.0, %v313
    %v315 = vpop.f32.mrb[0].mxu0
    %v316 = vadd.f32 0.0, %v315
    %v317 = vpop.f32.mrb[0].mxu0
    %v318 = vadd.f32 0.0, %v317
    %319 = vmatprep.mubr.bf16.mxu0 0
    %320 = vmatmul.mubr.bf16.gmra.mrb[0].mxu0 %v226
    %v321 = vpop.f32.mrb[0].mxu0
    %v322 = vadd.f32 0.0, %v321
    %v323 = vpop.f32.mrb[0].mxu0
    %v324 = vadd.f32 0.0, %v323
    %v325 = vpop.f32.mrb[0].mxu0
    %v326 = vadd.f32 0.0, %v325
    %v327 = vpop.f32.mrb[0].mxu0
    %v328 = vadd.f32 0.0, %v327
    %329 = vmatprep.mubr.bf16.mxu0 0
    %330 = vmatmul.mubr.bf16.gmra.mrb[0].mxu0 %v229
    %v331 = vpop.f32.mrb[0].mxu0
    %v332 = vadd.f32 0.0, %v331
    %v333 = vpop.f32.mrb[0].mxu0
    %v334 = vadd.f32 0.0, %v333
    %v335 = vpop.f32.mrb[0].mxu0
    %v336 = vadd.f32 0.0, %v335
    %v337 = vpop.f32.mrb[0].mxu0
    %v338 = vadd.f32 0.0, %v337
    %339 = vmatprep.mubr.bf16.mxu0 0
    %340 = vmatmul.mubr.bf16.gmra.mrb[0].mxu0 %v232
    %v341 = vpop.f32.mrb[0].mxu0
    %v342 = vadd.f32 0.0, %v341
    %v343 = vpop.f32.mrb[0].mxu0
    %v344 = vadd.f32 0.0, %v343
    %v345 = vpop.f32.mrb[0].mxu0
    %v346 = vadd.f32 0.0, %v345
    %v347 = vpop.f32.mrb[0].mxu0
    %v348 = vadd.f32 0.0, %v347
    %349 = vmatprep.mubr.bf16.mxu0 0
    %350 = vmatmul.mubr.bf16.gmra.mrb[0].mxu0 %v235
    %v351 = vpop.f32.mrb[0].mxu0
    %v352 = vadd.f32 0.0, %v351
    %v353 = vpop.f32.mrb[0].mxu0
    %v354 = vadd.f32 0.0, %v353
    %v355 = vpop.f32.mrb[0].mxu0
    %v356 = vadd.f32 0.0, %v355
    %v357 = vpop.f32.mrb[0].mxu0
    %v358 = vadd.f32 0.0, %v357
    %359 = vmatprep.mubr.bf16.mxu0 0
    %360 = vmatmul.mubr.bf16.gmra.mrb[0].mxu0 %v238
    %v361 = vpop.f32.mrb[0].mxu0
    %v362 = vadd.f32 0.0, %v361
    %v363 = vpop.f32.mrb[0].mxu0
    %v364 = vadd.f32 0.0, %v363
    %v365 = vpop.f32.mrb[0].mxu0
    %v366 = vadd.f32 0.0, %v365
    %v367 = vpop.f32.mrb[0].mxu0
    %v368 = vadd.f32 0.0, %v367
    %369 = vmatprep.mubr.bf16.mxu0 0
    %370 = vmatmul.mubr.bf16.gmra.mrb[0].mxu0 %v241
    %v371 = vpop.f32.mrb[0].mxu0
    %v372 = vadd.f32 0.0, %v371
    %v373 = vpop.f32.mrb[0].mxu0
    %v374 = vadd.f32 0.0, %v373
    %v375 = vpop.f32.mrb[0].mxu0
    %v376 = vadd.f32 0.0, %v375
    %v377 = vpop.f32.mrb[0].mxu0
    %v378 = vadd.f32 0.0, %v377
    %379 = vmatprep.mubr.bf16.mxu0 0
    %380 = vmatmul.mubr.bf16.gmra.mrb[0].mxu0 %v244
    %v381 = vpop.f32.mrb[0].mxu0
    %v382 = vadd.f32 0.0, %v381
    %v383 = vpop.f32.mrb[0].mxu0
    %v384 = vadd.f32 0.0, %v383
    %v385 = vpop.f32.mrb[0].mxu0
    %v386 = vadd.f32 0.0, %v385
    %v387 = vpop.f32.mrb[0].mxu0
    %v388 = vadd.f32 0.0, %v387
    %389 = vmatprep.mubr.bf16.mxu0 0
    %390 = vmatmul.mubr.bf16.gmra.mrb[0].mxu0 %v247
    %v391 = vpop.f32.mrb[0].mxu0
    %v392 = vadd.f32 0.0, %v391
    %v393 = vpop.f32.mrb[0].mxu0
    %v394 = vadd.f32 0.0, %v393
    %v395 = vpop.f32.mrb[0].mxu0
    %v396 = vadd.f32 0.0, %v395
    %v397 = vpop.f32.mrb[0].mxu0
    %v398 = vadd.f32 0.0, %v397
    %399 = vmatprep.mubr.bf16.mxu0 0
    %400 = vmatmul.mubr.bf16.gmra.mrb[0].mxu0 %v250
    %v401 = vpop.f32.mrb[0].mxu0
    %v402 = vadd.f32 0.0, %v401
    %v403 = vpop.f32.mrb[0].mxu0
    %v404 = vadd.f32 0.0, %v403
    %v405 = vpop.f32.mrb[0].mxu0
    %v406 = vadd.f32 0.0, %v405
    %v407 = vpop.f32.mrb[0].mxu0
    %v408 = vadd.f32 0.0, %v407
    %409 = vmatprep.mubr.bf16.mxu0 0
    %410 = vmatmul.mubr.bf16.gmra.mrb[0].mxu0 %v253
    %v411 = vpop.f32.mrb[0].mxu0
    %v412 = vadd.f32 0.0, %v411
    %v413 = vpop.f32.mrb[0].mxu0
    %v414 = vadd.f32 0.0, %v413
    %v415 = vpop.f32.mrb[0].mxu0
    %v416 = vadd.f32 0.0, %v415
    %v417 = vpop.f32.mrb[0].mxu0
    %v418 = vadd.f32 0.0, %v417
    %419 = vmatprep.mubr.bf16.mxu0 0
    %420 = vmatmul.mubr.bf16.gmra.mrb[0].mxu0 %v256
    %v421 = vpop.f32.mrb[0].mxu0
    %v422 = vadd.f32 0.0, %v421
    %v423 = vpop.f32.mrb[0].mxu0
    %v424 = vadd.f32 0.0, %v423
    %v425 = vpop.f32.mrb[0].mxu0
    %v426 = vadd.f32 0.0, %v425
    %v427 = vpop.f32.mrb[0].mxu0
    %v428 = vadd.f32 0.0, %v427
    %429 = vmatprep.mubr.bf16.mxu0 0
    %430 = vmatmul.mubr.bf16.gmra.mrb[0].mxu0 %v259
    %v431 = vpop.f32.mrb[0].mxu0
    %v432 = vadd.f32 0.0, %v431
    %v433 = vpop.f32.mrb[0].mxu0
    %v434 = vadd.f32 0.0, %v433
    %v435 = vpop.f32.mrb[0].mxu0
    %v436 = vadd.f32 0.0, %v435
    %v437 = vpop.f32.mrb[0].mxu0
    %v438 = vadd.f32 0.0, %v437
    %439 = vmatprep.mubr.bf16.mxu0 0
    %440 = vmatmul.mubr.bf16.gmra.mrb[0].mxu0 %v262
    %v441 = vpop.f32.mrb[0].mxu0
    %v442 = vadd.f32 0.0, %v441
    %v443 = vpop.f32.mrb[0].mxu0
    %v444 = vadd.f32 0.0, %v443
    %v445 = vpop.f32.mrb[0].mxu0
    %v446 = vadd.f32 0.0, %v445
    %v447 = vpop.f32.mrb[0].mxu0
    %v448 = vadd.f32 0.0, %v447
    %449 = vmatprep.mubr.bf16.mxu0 0
    %450 = vmatmul.mubr.bf16.gmra.mrb[0].mxu0 %v265
    %v451 = vpop.f32.mrb[0].mxu0
    %v452 = vadd.f32 0.0, %v451
    %v453 = vpop.f32.mrb[0].mxu0
    %v454 = vadd.f32 0.0, %v453
    %v455 = vpop.f32.mrb[0].mxu0
    %v456 = vadd.f32 0.0, %v455
    %v457 = vpop.f32.mrb[0].mxu0
    %v458 = vadd.f32 0.0, %v457
    %459 = vmatprep.mubr.bf16.mxu0 0
    %460 = vmatmul.mubr.bf16.gmra.mrb[0].mxu0 %v268
    %v461 = vpop.f32.mrb[0].mxu0
    %v462 = vadd.f32 0.0, %v461
    %v463 = vpop.f32.mrb[0].mxu0
    %v464 = vadd.f32 0.0, %v463
    %v465 = vpop.f32.mrb[0].mxu0
    %v466 = vadd.f32 0.0, %v465
    %v467 = vpop.f32.mrb[0].mxu0
    %v468 = vadd.f32 0.0, %v467
    %469 = vdwg.mxu0
    %v470 = vld [vmem:[#allocation4] sm:$0xff]
    %v471 = vld [vmem:[#allocation4 + $0x8] sm:$0xff]
    %v472 = vld [vmem:[#allocation4 + $0x10] sm:$0xff]
    %v473 = vld [vmem:[#allocation4 + $0x18] sm:$0xff]
    %v474 = vld [vmem:[#allocation4 + $0x20] sm:$0xff]
    %v475 = vld [vmem:[#allocation4 + $0x28] sm:$0xff]
    %v476 = vld [vmem:[#allocation4 + $0x30] sm:$0xff]
    %v477 = vld [vmem:[#allocation4 + $0x38] sm:$0xff]
    %v478 = vld [vmem:[#allocation4 + $0x40] sm:$0xff]
    %v479 = vld [vmem:[#allocation4 + $0x48] sm:$0xff]
    %v480 = vld [vmem:[#allocation4 + $0x50] sm:$0xff]
    %v481 = vld [vmem:[#allocation4 + $0x58] sm:$0xff]
    %v482 = vld [vmem:[#allocation4 + $0x60] sm:$0xff]
    %v483 = vld [vmem:[#allocation4 + $0x68] sm:$0xff]
    %v484 = vld [vmem:[#allocation4 + $0x70] sm:$0xff]
    %v485 = vld [vmem:[#allocation4 + $0x78] sm:$0xff]
    %v486 = vld [vmem:[#allocation4 + $0x80] sm:$0xff]
    %v487 = vld [vmem:[#allocation4 + $0x88] sm:$0xff]
    %v488 = vld [vmem:[#allocation4 + $0x90] sm:$0xff]
    %v489 = vld [vmem:[#allocation4 + $0x98] sm:$0xff]
    %v490 = vld [vmem:[#allocation4 + $0xa0] sm:$0xff]
    %v491 = vld [vmem:[#allocation4 + $0xa8] sm:$0xff]
    %v492 = vld [vmem:[#allocation4 + $0xb0] sm:$0xff]
    %v493 = vld [vmem:[#allocation4 + $0xb8] sm:$0xff]
    %v494 = vld [vmem:[#allocation4 + $0xc0] sm:$0xff]
    %v495 = vld [vmem:[#allocation4 + $0xc8] sm:$0xff]
    %v496 = vld [vmem:[#allocation4 + $0xd0] sm:$0xff]
    %v497 = vld [vmem:[#allocation4 + $0xd8] sm:$0xff]
    %v498 = vld [vmem:[#allocation4 + $0xe0] sm:$0xff]
    %v499 = vld [vmem:[#allocation4 + $0xe8] sm:$0xff]
    %v500 = vld [vmem:[#allocation4 + $0xf0] sm:$0xff]
    %v501 = vld [vmem:[#allocation4 + $0xf8] sm:$0xff]
    %v502 = vld [vmem:[#allocation4 + $0x100] sm:$0xff]
    %v503 = vld [vmem:[#allocation4 + $0x108] sm:$0xff]
    %v504 = vld [vmem:[#allocation4 + $0x110] sm:$0xff]
    %v505 = vld [vmem:[#allocation4 + $0x118] sm:$0xff]
    %v506 = vld [vmem:[#allocation4 + $0x120] sm:$0xff]
    %v507 = vld [vmem:[#allocation4 + $0x128] sm:$0xff]
    %v508 = vld [vmem:[#allocation4 + $0x130] sm:$0xff]
    %v509 = vld [vmem:[#allocation4 + $0x138] sm:$0xff]
    %v510 = vld [vmem:[#allocation4 + $0x140] sm:$0xff]
    %v511 = vld [vmem:[#allocation4 + $0x148] sm:$0xff]
    %v512 = vld [vmem:[#allocation4 + $0x150] sm:$0xff]
    %v513 = vld [vmem:[#allocation4 + $0x158] sm:$0xff]
    %v514 = vld [vmem:[#allocation4 + $0x160] sm:$0xff]
    %v515 = vld [vmem:[#allocation4 + $0x168] sm:$0xff]
    %v516 = vld [vmem:[#allocation4 + $0x170] sm:$0xff]
    %v517 = vld [vmem:[#allocation4 + $0x178] sm:$0xff]
    %v518 = vld [vmem:[#allocation4 + $0x180] sm:$0xff]
    %v519 = vld [vmem:[#allocation4 + $0x188] sm:$0xff]
    %v520 = vld [vmem:[#allocation4 + $0x190] sm:$0xff]
    %v521 = vld [vmem:[#allocation4 + $0x198] sm:$0xff]
    %v522 = vld [vmem:[#allocation4 + $0x1a0] sm:$0xff]
    %v523 = vld [vmem:[#allocation4 + $0x1a8] sm:$0xff]
    %v524 = vld [vmem:[#allocation4 + $0x1b0] sm:$0xff]
    %v525 = vld [vmem:[#allocation4 + $0x1b8] sm:$0xff]
    %v526 = vld [vmem:[#allocation4 + $0x1c0] sm:$0xff]
    %v527 = vld [vmem:[#allocation4 + $0x1c8] sm:$0xff]
    %v528 = vld [vmem:[#allocation4 + $0x1d0] sm:$0xff]
    %v529 = vld [vmem:[#allocation4 + $0x1d8] sm:$0xff]
    %v530 = vld [vmem:[#allocation4 + $0x1e0] sm:$0xff]
    %v531 = vld [vmem:[#allocation4 + $0x1e8] sm:$0xff]
    %v532 = vld [vmem:[#allocation4 + $0x1f0] sm:$0xff]
    %v533 = vld [vmem:[#allocation4 + $0x1f8] sm:$0xff]
    %v534 = vmul.f32 %v312, %v470
    %v535 = vmul.f32 %v314, %v471
    %v536 = vmul.f32 %v316, %v472
    %v537 = vmul.f32 %v318, %v473
    %v538 = vmul.f32 %v322, %v474
    %v539 = vmul.f32 %v324, %v475
    %v540 = vmul.f32 %v326, %v476
    %v541 = vmul.f32 %v328, %v477
    %v542 = vmul.f32 %v332, %v478
    %v543 = vmul.f32 %v334, %v479
    %v544 = vmul.f32 %v336, %v480
    %v545 = vmul.f32 %v338, %v481
    %v546 = vmul.f32 %v342, %v482
    %v547 = vmul.f32 %v344, %v483
    %v548 = vmul.f32 %v346, %v484
    %v549 = vmul.f32 %v348, %v485
    %v550 = vmul.f32 %v352, %v486
    %v551 = vmul.f32 %v354, %v487
    %v552 = vmul.f32 %v356, %v488
    %v553 = vmul.f32 %v358, %v489
    %v554 = vmul.f32 %v362, %v490
    %v555 = vmul.f32 %v364, %v491
    %v556 = vmul.f32 %v366, %v492
    %v557 = vmul.f32 %v368, %v493
    %v558 = vmul.f32 %v372, %v494
    %v559 = vmul.f32 %v374, %v495
    %v560 = vmul.f32 %v376, %v496
    %v561 = vmul.f32 %v378, %v497
    %v562 = vmul.f32 %v382, %v498
    %v563 = vmul.f32 %v384, %v499
    %v564 = vmul.f32 %v386, %v500
    %v565 = vmul.f32 %v388, %v501
    %v566 = vmul.f32 %v392, %v502
    %v567 = vmul.f32 %v394, %v503
    %v568 = vmul.f32 %v396, %v504
    %v569 = vmul.f32 %v398, %v505
    %v570 = vmul.f32 %v402, %v506
    %v571 = vmul.f32 %v404, %v507
    %v572 = vmul.f32 %v406, %v508
    %v573 = vmul.f32 %v408, %v509
    %v574 = vmul.f32 %v412, %v510
    %v575 = vmul.f32 %v414, %v511
    %v576 = vmul.f32 %v416, %v512
    %v577 = vmul.f32 %v418, %v513
    %v578 = vmul.f32 %v422, %v514
    %v579 = vmul.f32 %v424, %v515
    %v580 = vmul.f32 %v426, %v516
    %v581 = vmul.f32 %v428, %v517
    %v582 = vmul.f32 %v432, %v518
    %v583 = vmul.f32 %v434, %v519
    %v584 = vmul.f32 %v436, %v520
    %v585 = vmul.f32 %v438, %v521
    %v586 = vmul.f32 %v442, %v522
    %v587 = vmul.f32 %v444, %v523
    %v588 = vmul.f32 %v446, %v524
    %v589 = vmul.f32 %v448, %v525
    %v590 = vmul.f32 %v452, %v526
    %v591 = vmul.f32 %v454, %v527
    %v592 = vmul.f32 %v456, %v528
    %v593 = vmul.f32 %v458, %v529
    %v594 = vmul.f32 %v462, %v530
    %v595 = vmul.f32 %v464, %v531
    %v596 = vmul.f32 %v466, %v532
    %v597 = vmul.f32 %v468, %v533
    %v598 = vld [vmem:[#allocation7] sm:$0xff]
    %v599 = vld [vmem:[#allocation7 + $0x8] sm:$0xff]
    %v600 = vld [vmem:[#allocation7 + $0x10] sm:$0xff]
    %v601 = vld [vmem:[#allocation7 + $0x18] sm:$0xff]
    %v602 = vld [vmem:[%s6] sm:$0xff]
    %v603 = vld [vmem:[%s6 + $0x8] sm:$0xff]
    %v604 = vld [vmem:[%s6 + $0x10] sm:$0xff]
    %v605 = vld [vmem:[%s6 + $0x18] sm:$0xff]
    %s606 = scalar_lea.vmem %s6, 32
    %v607 = vld [vmem:[%s606] sm:$0xff]
    %v608 = vld [vmem:[%s606 + $0x8] sm:$0xff]
    %v609 = vld [vmem:[%s606 + $0x10] sm:$0xff]
    %v610 = vld [vmem:[%s606 + $0x18] sm:$0xff]
    %s611 = scalar_lea.vmem %s6, 64
    %v612 = vld [vmem:[%s611] sm:$0xff]
    %v613 = vld [vmem:[%s611 + $0x8] sm:$0xff]
    %v614 = vld [vmem:[%s611 + $0x10] sm:$0xff]
    %v615 = vld [vmem:[%s611 + $0x18] sm:$0xff]
    %617 = vset.pattern.permute.xlu0 1
    %618 = vperm.xlu0 %617, %v598
    %v619 = vpop.permute.xlu0 %618
    %622 = vset.pattern.permute.xlu0 1
    %623 = vperm.xlu0 %622, %v599
    %v624 = vpop.permute.xlu0 %623
    %627 = vset.pattern.permute.xlu0 1
    %628 = vperm.xlu0 %627, %v600
    %v629 = vpop.permute.xlu0 %628
    %632 = vset.pattern.permute.xlu0 1
    %633 = vperm.xlu0 %632, %v601
    %v634 = vpop.permute.xlu0 %633
    %636 = vset.pattern.permute.xlu0 2
    %637 = vperm.xlu0 %636, %v598
    %v638 = vpop.permute.xlu0 %637
    %640 = vset.pattern.permute.xlu0 2
    %641 = vperm.xlu0 %640, %v599
    %v642 = vpop.permute.xlu0 %641
    %644 = vset.pattern.permute.xlu0 2
    %645 = vperm.xlu0 %644, %v600
    %v646 = vpop.permute.xlu0 %645
    %648 = vset.pattern.permute.xlu0 2
    %649 = vperm.xlu0 %648, %v601
    %v650 = vpop.permute.xlu0 %649
    %652 = vset.pattern.permute.xlu0 3
    %653 = vperm.xlu0 %652, %v598
    %v654 = vpop.permute.xlu0 %653
    %656 = vset.pattern.permute.xlu0 3
    %657 = vperm.xlu0 %656, %v599
    %v658 = vpop.permute.xlu0 %657
    %660 = vset.pattern.permute.xlu0 3
    %661 = vperm.xlu0 %660, %v600
    %v662 = vpop.permute.xlu0 %661
    %664 = vset.pattern.permute.xlu0 3
    %665 = vperm.xlu0 %664, %v601
    %v666 = vpop.permute.xlu0 %665
    %668 = vset.pattern.permute.xlu0 0
    %669 = vperm.xlu0 %668, %v598
    %v670 = vpop.permute.xlu0 %669
    %672 = vset.pattern.permute.xlu0 0
    %673 = vperm.xlu0 %672, %v599
    %v674 = vpop.permute.xlu0 %673
    %676 = vset.pattern.permute.xlu0 0
    %677 = vperm.xlu0 %676, %v600
    %v678 = vpop.permute.xlu0 %677
    %680 = vset.pattern.permute.xlu0 0
    %681 = vperm.xlu0 %680, %v601
    %v682 = vpop.permute.xlu0 %681
    %v685 = vlaneseq
    %v686 = vshrl.u32 %v685, 7
    %v687 = vsub.s32 0, %v686
    %v688 = vrot.slane %v102, %v687
    %v689 = vlaneseq
    %v690 = vshrl.u32 %v689, 7
    %v691 = vsub.s32 1, %v690
    %v692 = vrot.slane %v102, %v691
    %v695 = vmul.f32 %v670, %v688
    %v696 = vmul.f32 %v670, %v692
    %v697 = vmul.f32 %v674, %v688
    %v698 = vmul.f32 %v674, %v692
    %v699 = vmul.f32 %v678, %v688
    %v700 = vmul.f32 %v678, %v692
    %v701 = vmul.f32 %v682, %v688
    %v702 = vmul.f32 %v682, %v692
    %v703 = vmax.f32 %v695, 0.0
    %v704 = vmax.f32 %v696, 0.0
    %v705 = vmax.f32 %v697, 0.0
    %v706 = vmax.f32 %v698, 0.0
    %v707 = vmax.f32 %v699, 0.0
    %v708 = vmax.f32 %v700, 0.0
    %v709 = vmax.f32 %v701, 0.0
    %v710 = vmax.f32 %v702, 0.0
    %vm711 = vcmask 261120
    %v713 = vsel %vm711, %v602, 0
    %v716 = vsel %vm711, %v603, 0
    %v719 = vsel %vm711, %v604, 0
    %v722 = vsel %vm711, %v605, 0
    %724 = vmatprep.subr.mxu0 %v704
    %725 = vmatpush1.msra.mxu0 %v703
    %726 = vmatprep.subr.mxu0 %v706
    %727 = vmatpush1.msra.mxu0 %v705
    %728 = vmatprep.subr.mxu0 %v708
    %729 = vmatpush1.msra.mxu0 %v707
    %730 = vmatprep.subr.mxu0 %v710
    %731 = vmatpush1.msra.mxu0 %v709
    %732 = vmatprep.subr.mxu0 0.0
    %733 = vmatpush1.msra.mxu0 0.0
    %734 = vmatprep.subr.mxu0 0.0
    %735 = vmatpush1.msra.mxu0 0.0
    %736 = vmatprep.subr.mxu0 0.0
    %737 = vmatpush1.msra.mxu0 0.0
    %738 = vmatprep.subr.mxu0 0.0
    %739 = vmatpush1.msra.mxu0 0.0
    %740 = vmatprep.subr.mxu0 0.0
    %741 = vmatpush1.msra.mxu0 0.0
    %742 = vmatprep.subr.mxu0 0.0
    %743 = vmatpush1.msra.mxu0 0.0
    %744 = vmatprep.subr.mxu0 0.0
    %745 = vmatpush1.msra.mxu0 0.0
    %746 = vmatprep.subr.mxu0 0.0
    %747 = vmatpush1.msra.mxu0 0.0
    %748 = vmatprep.subr.mxu0 0.0
    %749 = vmatpush1.msra.mxu0 0.0
    %750 = vmatprep.subr.mxu0 0.0
    %751 = vmatpush1.msra.mxu0 0.0
    %752 = vmatprep.subr.mxu0 0.0
    %753 = vmatpush1.msra.mxu0 0.0
    %754 = vmatprep.subr.mxu0 0.0
    %755 = vmatpush1.msra.mxu0 0.0
    %756 = vmatprep.subr.mxu0 0.0
    %757 = vmatpush1.msra.mxu0 0.0
    %758 = vmatprep.subr.mxu0 0.0
    %759 = vmatpush1.msra.mxu0 0.0
    %760 = vmatprep.subr.mxu0 0.0
    %761 = vmatpush1.msra.mxu0 0.0
    %762 = vmatprep.subr.mxu0 0.0
    %763 = vmatpush1.msra.mxu0 0.0
    %764 = vmatprep.subr.mxu0 0.0
    %765 = vmatpush1.msra.mxu0 0.0
    %766 = vmatprep.subr.mxu0 0.0
    %767 = vmatpush1.msra.mxu0 0.0
    %768 = vmatprep.subr.mxu0 0.0
    %769 = vmatpush1.msra.mxu0 0.0
    %770 = vmatprep.subr.mxu0 0.0
    %771 = vmatpush1.msra.mxu0 0.0
    %772 = vmatprep.subr.mxu0 0.0
    %773 = vmatpush1.msra.mxu0 0.0
    %774 = vmatprep.subr.mxu0 0.0
    %775 = vmatpush1.msra.mxu0 0.0
    %776 = vmatprep.subr.mxu0 0.0
    %777 = vmatpush1.msra.mxu0 0.0
    %778 = vmatprep.subr.mxu0 0.0
    %779 = vmatpush1.msra.mxu0 0.0
    %780 = vmatprep.subr.mxu0 0.0
    %781 = vmatpush1.msra.mxu0 0.0
    %782 = vmatprep.subr.mxu0 0.0
    %783 = vmatpush1.msra.mxu0 0.0
    %784 = vmatprep.subr.mxu0 0.0
    %785 = vmatpush1.msra.mxu0 0.0
    %786 = vmatprep.subr.mxu0 0.0
    %787 = vmatpush1.msra.mxu0 0.0
    %788 = vmatprep.mubr.f32.mxu0 0.0
    %789 = vmatmul.mubr.f32.gmra.mrb[0].mxu0 %v713
    %v790 = vpop.f32.mrb[0].mxu0
    %v791 = vadd.f32 %v619, %v790
    %v792 = vpop.f32.mrb[0].mxu0
    %v793 = vadd.f32 %v619, %v792
    %794 = vmatprep.mubr.f32.mxu0 0.0
    %795 = vmatmul.mubr.f32.gmra.mrb[0].mxu0 %v716
    %v796 = vpop.f32.mrb[0].mxu0
    %v797 = vadd.f32 %v624, %v796
    %v798 = vpop.f32.mrb[0].mxu0
    %v799 = vadd.f32 %v624, %v798
    %800 = vmatprep.mubr.f32.mxu0 0.0
    %801 = vmatmul.mubr.f32.gmra.mrb[0].mxu0 %v719
    %v802 = vpop.f32.mrb[0].mxu0
    %v803 = vadd.f32 %v629, %v802
    %v804 = vpop.f32.mrb[0].mxu0
    %v805 = vadd.f32 %v629, %v804
    %806 = vmatprep.mubr.f32.mxu0 0.0
    %807 = vmatmul.mubr.f32.gmra.mrb[0].mxu0 %v722
    %v808 = vpop.f32.mrb[0].mxu0
    %v809 = vadd.f32 %v634, %v808
    %v810 = vpop.f32.mrb[0].mxu0
    %v811 = vadd.f32 %v634, %v810
    %812 = vdwg.mxu0
    %v813 = vmax.f32 %v791, 0.0
    %v814 = vmax.f32 %v793, 0.0
    %v815 = vmax.f32 %v797, 0.0
    %v816 = vmax.f32 %v799, 0.0
    %v817 = vmax.f32 %v803, 0.0
    %v818 = vmax.f32 %v805, 0.0
    %v819 = vmax.f32 %v809, 0.0
    %v820 = vmax.f32 %v811, 0.0
    %821 = vmatprep.subr.mxu0 %v535
    %822 = vmatpush1.msra.mxu0 %v534
    %823 = vmatprep.subr.mxu0 %v537
    %824 = vmatpush1.msra.mxu0 %v536
    %825 = vmatprep.subr.mxu0 %v539
    %826 = vmatpush1.msra.mxu0 %v538
    %827 = vmatprep.subr.mxu0 %v541
    %828 = vmatpush1.msra.mxu0 %v540
    %829 = vmatprep.subr.mxu0 %v543
    %830 = vmatpush1.msra.mxu0 %v542
    %831 = vmatprep.subr.mxu0 %v545
    %832 = vmatpush1.msra.mxu0 %v544
    %833 = vmatprep.subr.mxu0 %v547
    %834 = vmatpush1.msra.mxu0 %v546
    %835 = vmatprep.subr.mxu0 %v549
    %836 = vmatpush1.msra.mxu0 %v548
    %837 = vmatprep.subr.mxu0 %v551
    %838 = vmatpush1.msra.mxu0 %v550
    %839 = vmatprep.subr.mxu0 %v553
    %840 = vmatpush1.msra.mxu0 %v552
    %841 = vmatprep.subr.mxu0 %v555
    %842 = vmatpush1.msra.mxu0 %v554
    %843 = vmatprep.subr.mxu0 %v557
    %844 = vmatpush1.msra.mxu0 %v556
    %845 = vmatprep.subr.mxu0 %v559
    %846 = vmatpush1.msra.mxu0 %v558
    %847 = vmatprep.subr.mxu0 %v561
    %848 = vmatpush1.msra.mxu0 %v560
    %849 = vmatprep.subr.mxu0 %v563
    %850 = vmatpush1.msra.mxu0 %v562
    %851 = vmatprep.subr.mxu0 %v565
    %852 = vmatpush1.msra.mxu0 %v564
    %853 = vmatprep.subr.mxu0 %v567
    %854 = vmatpush1.msra.mxu0 %v566
    %855 = vmatprep.subr.mxu0 %v569
    %856 = vmatpush1.msra.mxu0 %v568
    %857 = vmatprep.subr.mxu0 %v571
    %858 = vmatpush1.msra.mxu0 %v570
    %859 = vmatprep.subr.mxu0 %v573
    %860 = vmatpush1.msra.mxu0 %v572
    %861 = vmatprep.subr.mxu0 %v575
    %862 = vmatpush1.msra.mxu0 %v574
    %863 = vmatprep.subr.mxu0 %v577
    %864 = vmatpush1.msra.mxu0 %v576
    %865 = vmatprep.subr.mxu0 %v579
    %866 = vmatpush1.msra.mxu0 %v578
    %867 = vmatprep.subr.mxu0 %v581
    %868 = vmatpush1.msra.mxu0 %v580
    %869 = vmatprep.subr.mxu0 %v583
    %870 = vmatpush1.msra.mxu0 %v582
    %871 = vmatprep.subr.mxu0 %v585
    %872 = vmatpush1.msra.mxu0 %v584
    %873 = vmatprep.subr.mxu0 %v587
    %874 = vmatpush1.msra.mxu0 %v586
    %875 = vmatprep.subr.mxu0 %v589
    %876 = vmatpush1.msra.mxu0 %v588
    %877 = vmatprep.subr.mxu0 %v591
    %878 = vmatpush1.msra.mxu0 %v590
    %879 = vmatprep.subr.mxu0 %v593
    %880 = vmatpush1.msra.mxu0 %v592
    %881 = vmatprep.subr.mxu0 %v595
    %882 = vmatpush1.msra.mxu0 %v594
    %883 = vmatprep.subr.mxu0 %v597
    %884 = vmatpush1.msra.mxu0 %v596
    %885 = vmatprep.mubr.f32.mxu0 %v814
    %886 = vmatmul.mubr.f32.gmra.mrb[0].mxu0 %v813
    %v887 = vpop.f32.mrb[0].mxu0
    %v888 = vadd.f32 0.0, %v887
    %v889 = vpop.f32.mrb[0].mxu0
    %v890 = vadd.f32 0.0, %v889
    %891 = vmatprep.mubr.f32.mxu0 %v816
    %892 = vmatmul.mubr.f32.gmra.mrb[0].mxu0 %v815
    %v893 = vpop.f32.mrb[0].mxu0
    %v894 = vadd.f32 0.0, %v893
    %v895 = vpop.f32.mrb[0].mxu0
    %v896 = vadd.f32 0.0, %v895
    %897 = vmatprep.mubr.f32.mxu0 %v818
    %898 = vmatmul.mubr.f32.gmra.mrb[0].mxu0 %v817
    %v899 = vpop.f32.mrb[0].mxu0
    %v900 = vadd.f32 0.0, %v899
    %v901 = vpop.f32.mrb[0].mxu0
    %v902 = vadd.f32 0.0, %v901
    %903 = vmatprep.mubr.f32.mxu0 %v820
    %904 = vmatmul.mubr.f32.gmra.mrb[0].mxu0 %v819
    %v905 = vpop.f32.mrb[0].mxu0
    %v906 = vadd.f32 0.0, %v905
    %v907 = vpop.f32.mrb[0].mxu0
    %v908 = vadd.f32 0.0, %v907
    %909 = vdwg.mxu0
    %v911 = vsel %vm711, %v607, 0
    %v914 = vsel %vm711, %v608, 0
    %v917 = vsel %vm711, %v609, 0
    %v920 = vsel %vm711, %v610, 0
    %922 = vmatprep.subr.mxu0 %v890
    %923 = vmatpush1.msra.mxu0 %v888
    %924 = vmatprep.subr.mxu0 %v896
    %925 = vmatpush1.msra.mxu0 %v894
    %926 = vmatprep.subr.mxu0 %v902
    %927 = vmatpush1.msra.mxu0 %v900
    %928 = vmatprep.subr.mxu0 %v908
    %929 = vmatpush1.msra.mxu0 %v906
    %930 = vmatprep.subr.mxu0 0.0
    %931 = vmatpush1.msra.mxu0 0.0
    %932 = vmatprep.subr.mxu0 0.0
    %933 = vmatpush1.msra.mxu0 0.0
    %934 = vmatprep.subr.mxu0 0.0
    %935 = vmatpush1.msra.mxu0 0.0
    %936 = vmatprep.subr.mxu0 0.0
    %937 = vmatpush1.msra.mxu0 0.0
    %938 = vmatprep.subr.mxu0 0.0
    %939 = vmatpush1.msra.mxu0 0.0
    %940 = vmatprep.subr.mxu0 0.0
    %941 = vmatpush1.msra.mxu0 0.0
    %942 = vmatprep.subr.mxu0 0.0
    %943 = vmatpush1.msra.mxu0 0.0
    %944 = vmatprep.subr.mxu0 0.0
    %945 = vmatpush1.msra.mxu0 0.0
    %946 = vmatprep.subr.mxu0 0.0
    %947 = vmatpush1.msra.mxu0 0.0
    %948 = vmatprep.subr.mxu0 0.0
    %949 = vmatpush1.msra.mxu0 0.0
    %950 = vmatprep.subr.mxu0 0.0
    %951 = vmatpush1.msra.mxu0 0.0
    %952 = vmatprep.subr.mxu0 0.0
    %953 = vmatpush1.msra.mxu0 0.0
    %954 = vmatprep.subr.mxu0 0.0
    %955 = vmatpush1.msra.mxu0 0.0
    %956 = vmatprep.subr.mxu0 0.0
    %957 = vmatpush1.msra.mxu0 0.0
    %958 = vmatprep.subr.mxu0 0.0
    %959 = vmatpush1.msra.mxu0 0.0
    %960 = vmatprep.subr.mxu0 0.0
    %961 = vmatpush1.msra.mxu0 0.0
    %962 = vmatprep.subr.mxu0 0.0
    %963 = vmatpush1.msra.mxu0 0.0
    %964 = vmatprep.subr.mxu0 0.0
    %965 = vmatpush1.msra.mxu0 0.0
    %966 = vmatprep.subr.mxu0 0.0
    %967 = vmatpush1.msra.mxu0 0.0
    %968 = vmatprep.subr.mxu0 0.0
    %969 = vmatpush1.msra.mxu0 0.0
    %970 = vmatprep.subr.mxu0 0.0
    %971 = vmatpush1.msra.mxu0 0.0
    %972 = vmatprep.subr.mxu0 0.0
    %973 = vmatpush1.msra.mxu0 0.0
    %974 = vmatprep.subr.mxu0 0.0
    %975 = vmatpush1.msra.mxu0 0.0
    %976 = vmatprep.subr.mxu0 0.0
    %977 = vmatpush1.msra.mxu0 0.0
    %978 = vmatprep.subr.mxu0 0.0
    %979 = vmatpush1.msra.mxu0 0.0
    %980 = vmatprep.subr.mxu0 0.0
    %981 = vmatpush1.msra.mxu0 0.0
    %982 = vmatprep.subr.mxu0 0.0
    %983 = vmatpush1.msra.mxu0 0.0
    %984 = vmatprep.subr.mxu0 0.0
    %985 = vmatpush1.msra.mxu0 0.0
    %986 = vmatprep.mubr.f32.mxu0 0.0
    %987 = vmatmul.mubr.f32.gmra.mrb[0].mxu0 %v911
    %v988 = vpop.f32.mrb[0].mxu0
    %v989 = vadd.f32 %v638, %v988
    %v990 = vpop.f32.mrb[0].mxu0
    %v991 = vadd.f32 %v638, %v990
    %992 = vmatprep.mubr.f32.mxu0 0.0
    %993 = vmatmul.mubr.f32.gmra.mrb[0].mxu0 %v914
    %v994 = vpop.f32.mrb[0].mxu0
    %v995 = vadd.f32 %v642, %v994
    %v996 = vpop.f32.mrb[0].mxu0
    %v997 = vadd.f32 %v642, %v996
    %998 = vmatprep.mubr.f32.mxu0 0.0
    %999 = vmatmul.mubr.f32.gmra.mrb[0].mxu0 %v917
    %v1000 = vpop.f32.mrb[0].mxu0
    %v1001 = vadd.f32 %v646, %v1000
    %v1002 = vpop.f32.mrb[0].mxu0
    %v1003 = vadd.f32 %v646, %v1002
    %1004 = vmatprep.mubr.f32.mxu0 0.0
    %1005 = vmatmul.mubr.f32.gmra.mrb[0].mxu0 %v920
    %v1006 = vpop.f32.mrb[0].mxu0
    %v1007 = vadd.f32 %v650, %v1006
    %v1008 = vpop.f32.mrb[0].mxu0
    %v1009 = vadd.f32 %v650, %v1008
    %1010 = vdwg.mxu0
    %v1011 = vmax.f32 %v989, 0.0
    %v1012 = vmax.f32 %v991, 0.0
    %v1013 = vmax.f32 %v995, 0.0
    %v1014 = vmax.f32 %v997, 0.0
    %v1015 = vmax.f32 %v1001, 0.0
    %v1016 = vmax.f32 %v1003, 0.0
    %v1017 = vmax.f32 %v1007, 0.0
    %v1018 = vmax.f32 %v1009, 0.0
    %v1020 = vsel %vm711, %v612, 0
    %v1023 = vsel %vm711, %v613, 0
    %v1026 = vsel %vm711, %v614, 0
    %v1029 = vsel %vm711, %v615, 0
    %1031 = vmatprep.subr.mxu0 %v1012
    %1032 = vmatpush1.msra.mxu0 %v1011
    %1033 = vmatprep.subr.mxu0 %v1014
    %1034 = vmatpush1.msra.mxu0 %v1013
    %1035 = vmatprep.subr.mxu0 %v1016
    %1036 = vmatpush1.msra.mxu0 %v1015
    %1037 = vmatprep.subr.mxu0 %v1018
    %1038 = vmatpush1.msra.mxu0 %v1017
    %1039 = vmatprep.subr.mxu0 0.0
    %1040 = vmatpush1.msra.mxu0 0.0
    %1041 = vmatprep.subr.mxu0 0.0
    %1042 = vmatpush1.msra.mxu0 0.0
    %1043 = vmatprep.subr.mxu0 0.0
    %1044 = vmatpush1.msra.mxu0 0.0
    %1045 = vmatprep.subr.mxu0 0.0
    %1046 = vmatpush1.msra.mxu0 0.0
    %1047 = vmatprep.subr.mxu0 0.0
    %1048 = vmatpush1.msra.mxu0 0.0
    %1049 = vmatprep.subr.mxu0 0.0
    %1050 = vmatpush1.msra.mxu0 0.0
    %1051 = vmatprep.subr.mxu0 0.0
    %1052 = vmatpush1.msra.mxu0 0.0
    %1053 = vmatprep.subr.mxu0 0.0
    %1054 = vmatpush1.msra.mxu0 0.0
    %1055 = vmatprep.subr.mxu0 0.0
    %1056 = vmatpush1.msra.mxu0 0.0
    %1057 = vmatprep.subr.mxu0 0.0
    %1058 = vmatpush1.msra.mxu0 0.0
    %1059 = vmatprep.subr.mxu0 0.0
    %1060 = vmatpush1.msra.mxu0 0.0
    %1061 = vmatprep.subr.mxu0 0.0
    %1062 = vmatpush1.msra.mxu0 0.0
    %1063 = vmatprep.subr.mxu0 0.0
    %1064 = vmatpush1.msra.mxu0 0.0
    %1065 = vmatprep.subr.mxu0 0.0
    %1066 = vmatpush1.msra.mxu0 0.0
    %1067 = vmatprep.subr.mxu0 0.0
    %1068 = vmatpush1.msra.mxu0 0.0
    %1069 = vmatprep.subr.mxu0 0.0
    %1070 = vmatpush1.msra.mxu0 0.0
    %1071 = vmatprep.subr.mxu0 0.0
    %1072 = vmatpush1.msra.mxu0 0.0
    %1073 = vmatprep.subr.mxu0 0.0
    %1074 = vmatpush1.msra.mxu0 0.0
    %1075 = vmatprep.subr.mxu0 0.0
    %1076 = vmatpush1.msra.mxu0 0.0
    %1077 = vmatprep.subr.mxu0 0.0
    %1078 = vmatpush1.msra.mxu0 0.0
    %1079 = vmatprep.subr.mxu0 0.0
    %1080 = vmatpush1.msra.mxu0 0.0
    %1081 = vmatprep.subr.mxu0 0.0
    %1082 = vmatpush1.msra.mxu0 0.0
    %1083 = vmatprep.subr.mxu0 0.0
    %1084 = vmatpush1.msra.mxu0 0.0
    %1085 = vmatprep.subr.mxu0 0.0
    %1086 = vmatpush1.msra.mxu0 0.0
    %1087 = vmatprep.subr.mxu0 0.0
    %1088 = vmatpush1.msra.mxu0 0.0
    %1089 = vmatprep.subr.mxu0 0.0
    %1090 = vmatpush1.msra.mxu0 0.0
    %1091 = vmatprep.subr.mxu0 0.0
    %1092 = vmatpush1.msra.mxu0 0.0
    %1093 = vmatprep.subr.mxu0 0.0
    %1094 = vmatpush1.msra.mxu0 0.0
    %1095 = vmatprep.mubr.f32.mxu0 0.0
    %1096 = vmatmul.mubr.f32.gmra.mrb[0].mxu0 %v1020
    %v1097 = vpop.f32.mrb[0].mxu0
    %v1098 = vadd.f32 %v654, %v1097
    %v1099 = vpop.f32.mrb[0].mxu0
    %v1100 = vadd.f32 %v654, %v1099
    %1101 = vmatprep.mubr.f32.mxu0 0.0
    %1102 = vmatmul.mubr.f32.gmra.mrb[0].mxu0 %v1023
    %v1103 = vpop.f32.mrb[0].mxu0
    %v1104 = vadd.f32 %v658, %v1103
    %v1105 = vpop.f32.mrb[0].mxu0
    %v1106 = vadd.f32 %v658, %v1105
    %1107 = vmatprep.mubr.f32.mxu0 0.0
    %1108 = vmatmul.mubr.f32.gmra.mrb[0].mxu0 %v1026
    %v1109 = vpop.f32.mrb[0].mxu0
    %v1110 = vadd.f32 %v662, %v1109
    %v1111 = vpop.f32.mrb[0].mxu0
    %v1112 = vadd.f32 %v662, %v1111
    %1113 = vmatprep.mubr.f32.mxu0 0.0
    %1114 = vmatmul.mubr.f32.gmra.mrb[0].mxu0 %v1029
    %v1115 = vpop.f32.mrb[0].mxu0
    %v1116 = vadd.f32 %v666, %v1115
    %v1117 = vpop.f32.mrb[0].mxu0
    %v1118 = vadd.f32 %v666, %v1117
    %1119 = vdwg.mxu0
    %v1120 = vadd.f32 %v703, %v1098
    %v1121 = vadd.f32 %v704, %v1100
    %v1122 = vadd.f32 %v705, %v1104
    %v1123 = vadd.f32 %v706, %v1106
    %v1124 = vadd.f32 %v707, %v1110
    %v1125 = vadd.f32 %v708, %v1112
    %v1126 = vadd.f32 %v709, %v1116
    %v1127 = vadd.f32 %v710, %v1118
    %v1128 = vmax.f32 %v1120, 0.0
    %v1129 = vmax.f32 %v1121, 0.0
    %v1130 = vmax.f32 %v1122, 0.0
    %v1131 = vmax.f32 %v1123, 0.0
    %v1132 = vmax.f32 %v1124, 0.0
    %v1133 = vmax.f32 %v1125, 0.0
    %v1134 = vmax.f32 %v1126, 0.0
    %v1135 = vmax.f32 %v1127, 0.0
    %1136 = vmatprep.subr.mxu0 %v1129
    %1137 = vmatpush1.msra.mxu0 %v1128
    %1138 = vmatprep.subr.mxu0 %v1131
    %1139 = vmatpush1.msra.mxu0 %v1130
    %1140 = vmatprep.subr.mxu0 %v1133
    %1141 = vmatpush1.msra.mxu0 %v1132
    %1142 = vmatprep.subr.mxu0 %v1135
    %1143 = vmatpush1.msra.mxu0 %v1134
    %1144 = vmatprep.subr.mxu0 0.0
    %1145 = vmatpush1.msra.mxu0 0.0
    %1146 = vmatprep.subr.mxu0 0.0
    %1147 = vmatpush1.msra.mxu0 0.0
    %1148 = vmatprep.subr.mxu0 0.0
    %1149 = vmatpush1.msra.mxu0 0.0
    %1150 = vmatprep.subr.mxu0 0.0
    %1151 = vmatpush1.msra.mxu0 0.0
    %1152 = vmatprep.subr.mxu0 0.0
    %1153 = vmatpush1.msra.mxu0 0.0
    %1154 = vmatprep.subr.mxu0 0.0
    %1155 = vmatpush1.msra.mxu0 0.0
    %1156 = vmatprep.subr.mxu0 0.0
    %1157 = vmatpush1.msra.mxu0 0.0
    %1158 = vmatprep.subr.mxu0 0.0
    %1159 = vmatpush1.msra.mxu0 0.0
    %1160 = vmatprep.subr.mxu0 0.0
    %1161 = vmatpush1.msra.mxu0 0.0
    %1162 = vmatprep.subr.mxu0 0.0
    %1163 = vmatpush1.msra.mxu0 0.0
    %1164 = vmatprep.subr.mxu0 0.0
    %1165 = vmatpush1.msra.mxu0 0.0
    %1166 = vmatprep.subr.mxu0 0.0
    %1167 = vmatpush1.msra.mxu0 0.0
    %1168 = vmatprep.subr.mxu0 0.0
    %1169 = vmatpush1.msra.mxu0 0.0
    %1170 = vmatprep.subr.mxu0 0.0
    %1171 = vmatpush1.msra.mxu0 0.0
    %1172 = vmatprep.subr.mxu0 0.0
    %1173 = vmatpush1.msra.mxu0 0.0
    %1174 = vmatprep.subr.mxu0 0.0
    %1175 = vmatpush1.msra.mxu0 0.0
    %1176 = vmatprep.subr.mxu0 0.0
    %1177 = vmatpush1.msra.mxu0 0.0
    %1178 = vmatprep.subr.mxu0 0.0
    %1179 = vmatpush1.msra.mxu0 0.0
    %1180 = vmatprep.subr.mxu0 0.0
    %1181 = vmatpush1.msra.mxu0 0.0
    %1182 = vmatprep.subr.mxu0 0.0
    %1183 = vmatpush1.msra.mxu0 0.0
    %1184 = vmatprep.subr.mxu0 0.0
    %1185 = vmatpush1.msra.mxu0 0.0
    %1186 = vmatprep.subr.mxu0 0.0
    %1187 = vmatpush1.msra.mxu0 0.0
    %1188 = vmatprep.subr.mxu0 0.0
    %1189 = vmatpush1.msra.mxu0 0.0
    %1190 = vmatprep.subr.mxu0 0.0
    %1191 = vmatpush1.msra.mxu0 0.0
    %1192 = vmatprep.subr.mxu0 0.0
    %1193 = vmatpush1.msra.mxu0 0.0
    %1194 = vmatprep.subr.mxu0 0.0
    %1195 = vmatpush1.msra.mxu0 0.0
    %1196 = vmatprep.subr.mxu0 0.0
    %1197 = vmatpush1.msra.mxu0 0.0
    %1198 = vmatprep.subr.mxu0 0.0
    %1199 = vmatpush1.msra.mxu0 0.0
    %1200 = vmatprep.mubr.f32.mxu0 0.0
    %1201 = vmatmul.mubr.f32.gmra.mrb[0].mxu0 %v713
    %v1202 = vpop.f32.mrb[0].mxu0
    %v1203 = vadd.f32 %v619, %v1202
    %v1204 = vpop.f32.mrb[0].mxu0
    %v1205 = vadd.f32 %v619, %v1204
    %1206 = vmatprep.mubr.f32.mxu0 0.0
    %1207 = vmatmul.mubr.f32.gmra.mrb[0].mxu0 %v716
    %v1208 = vpop.f32.mrb[0].mxu0
    %v1209 = vadd.f32 %v624, %v1208
    %v1210 = vpop.f32.mrb[0].mxu0
    %v1211 = vadd.f32 %v624, %v1210
    %1212 = vmatprep.mubr.f32.mxu0 0.0
    %1213 = vmatmul.mubr.f32.gmra.mrb[0].mxu0 %v719
    %v1214 = vpop.f32.mrb[0].mxu0
    %v1215 = vadd.f32 %v629, %v1214
    %v1216 = vpop.f32.mrb[0].mxu0
    %v1217 = vadd.f32 %v629, %v1216
    %1218 = vmatprep.mubr.f32.mxu0 0.0
    %1219 = vmatmul.mubr.f32.gmra.mrb[0].mxu0 %v722
    %v1220 = vpop.f32.mrb[0].mxu0
    %v1221 = vadd.f32 %v634, %v1220
    %v1222 = vpop.f32.mrb[0].mxu0
    %v1223 = vadd.f32 %v634, %v1222
    %1224 = vdwg.mxu0
    %v1225 = vmax.f32 %v1203, 0.0
    %v1226 = vmax.f32 %v1205, 0.0
    %v1227 = vmax.f32 %v1209, 0.0
    %v1228 = vmax.f32 %v1211, 0.0
    %v1229 = vmax.f32 %v1215, 0.0
    %v1230 = vmax.f32 %v1217, 0.0
    %v1231 = vmax.f32 %v1221, 0.0
    %v1232 = vmax.f32 %v1223, 0.0
    %1233 = vmatprep.subr.mxu0 %v535
    %1234 = vmatpush1.msra.mxu0 %v534
    %1235 = vmatprep.subr.mxu0 %v537
    %1236 = vmatpush1.msra.mxu0 %v536
    %1237 = vmatprep.subr.mxu0 %v539
    %1238 = vmatpush1.msra.mxu0 %v538
    %1239 = vmatprep.subr.mxu0 %v541
    %1240 = vmatpush1.msra.mxu0 %v540
    %1241 = vmatprep.subr.mxu0 %v543
    %1242 = vmatpush1.msra.mxu0 %v542
    %1243 = vmatprep.subr.mxu0 %v545
    %1244 = vmatpush1.msra.mxu0 %v544
    %1245 = vmatprep.subr.mxu0 %v547
    %1246 = vmatpush1.msra.mxu0 %v546
    %1247 = vmatprep.subr.mxu0 %v549
    %1248 = vmatpush1.msra.mxu0 %v548
    %1249 = vmatprep.subr.mxu0 %v551
    %1250 = vmatpush1.msra.mxu0 %v550
    %1251 = vmatprep.subr.mxu0 %v553
    %1252 = vmatpush1.msra.mxu0 %v552
    %1253 = vmatprep.subr.mxu0 %v555
    %1254 = vmatpush1.msra.mxu0 %v554
    %1255 = vmatprep.subr.mxu0 %v557
    %1256 = vmatpush1.msra.mxu0 %v556
    %1257 = vmatprep.subr.mxu0 %v559
    %1258 = vmatpush1.msra.mxu0 %v558
    %1259 = vmatprep.subr.mxu0 %v561
    %1260 = vmatpush1.msra.mxu0 %v560
    %1261 = vmatprep.subr.mxu0 %v563
    %1262 = vmatpush1.msra.mxu0 %v562
    %1263 = vmatprep.subr.mxu0 %v565
    %1264 = vmatpush1.msra.mxu0 %v564
    %1265 = vmatprep.subr.mxu0 %v567
    %1266 = vmatpush1.msra.mxu0 %v566
    %1267 = vmatprep.subr.mxu0 %v569
    %1268 = vmatpush1.msra.mxu0 %v568
    %1269 = vmatprep.subr.mxu0 %v571
    %1270 = vmatpush1.msra.mxu0 %v570
    %1271 = vmatprep.subr.mxu0 %v573
    %1272 = vmatpush1.msra.mxu0 %v572
    %1273 = vmatprep.subr.mxu0 %v575
    %1274 = vmatpush1.msra.mxu0 %v574
    %1275 = vmatprep.subr.mxu0 %v577
    %1276 = vmatpush1.msra.mxu0 %v576
    %1277 = vmatprep.subr.mxu0 %v579
    %1278 = vmatpush1.msra.mxu0 %v578
    %1279 = vmatprep.subr.mxu0 %v581
    %1280 = vmatpush1.msra.mxu0 %v580
    %1281 = vmatprep.subr.mxu0 %v583
    %1282 = vmatpush1.msra.mxu0 %v582
    %1283 = vmatprep.subr.mxu0 %v585
    %1284 = vmatpush1.msra.mxu0 %v584
    %1285 = vmatprep.subr.mxu0 %v587
    %1286 = vmatpush1.msra.mxu0 %v586
    %1287 = vmatprep.subr.mxu0 %v589
    %1288 = vmatpush1.msra.mxu0 %v588
    %1289 = vmatprep.subr.mxu0 %v591
    %1290 = vmatpush1.msra.mxu0 %v590
    %1291 = vmatprep.subr.mxu0 %v593
    %1292 = vmatpush1.msra.mxu0 %v592
    %1293 = vmatprep.subr.mxu0 %v595
    %1294 = vmatpush1.msra.mxu0 %v594
    %1295 = vmatprep.subr.mxu0 %v597
    %1296 = vmatpush1.msra.mxu0 %v596
    %1297 = vmatprep.mubr.f32.mxu0 %v1226
    %1298 = vmatmul.mubr.f32.gmra.mrb[0].mxu0 %v1225
    %v1299 = vpop.f32.mrb[0].mxu0
    %v1300 = vadd.f32 0.0, %v1299
    %v1301 = vpop.f32.mrb[0].mxu0
    %v1302 = vadd.f32 0.0, %v1301
    %1303 = vmatprep.mubr.f32.mxu0 %v1228
    %1304 = vmatmul.mubr.f32.gmra.mrb[0].mxu0 %v1227
    %v1305 = vpop.f32.mrb[0].mxu0
    %v1306 = vadd.f32 0.0, %v1305
    %v1307 = vpop.f32.mrb[0].mxu0
    %v1308 = vadd.f32 0.0, %v1307
    %1309 = vmatprep.mubr.f32.mxu0 %v1230
    %1310 = vmatmul.mubr.f32.gmra.mrb[0].mxu0 %v1229
    %v1311 = vpop.f32.mrb[0].mxu0
    %v1312 = vadd.f32 0.0, %v1311
    %v1313 = vpop.f32.mrb[0].mxu0
    %v1314 = vadd.f32 0.0, %v1313
    %1315 = vmatprep.mubr.f32.mxu0 %v1232
    %1316 = vmatmul.mubr.f32.gmra.mrb[0].mxu0 %v1231
    %v1317 = vpop.f32.mrb[0].mxu0
    %v1318 = vadd.f32 0.0, %v1317
    %v1319 = vpop.f32.mrb[0].mxu0
    %v1320 = vadd.f32 0.0, %v1319
    %1321 = vdwg.mxu0
    %1322 = vmatprep.subr.mxu0 %v1302
    %1323 = vmatpush1.msra.mxu0 %v1300
    %1324 = vmatprep.subr.mxu0 %v1308
    %1325 = vmatpush1.msra.mxu0 %v1306
    %1326 = vmatprep.subr.mxu0 %v1314
    %1327 = vmatpush1.msra.mxu0 %v1312
    %1328 = vmatprep.subr.mxu0 %v1320
    %1329 = vmatpush1.msra.mxu0 %v1318
    %1330 = vmatprep.subr.mxu0 0.0
    %1331 = vmatpush1.msra.mxu0 0.0
    %1332 = vmatprep.subr.mxu0 0.0
    %1333 = vmatpush1.msra.mxu0 0.0
    %1334 = vmatprep.subr.mxu0 0.0
    %1335 = vmatpush1.msra.mxu0 0.0
    %1336 = vmatprep.subr.mxu0 0.0
    %1337 = vmatpush1.msra.mxu0 0.0
    %1338 = vmatprep.subr.mxu0 0.0
    %1339 = vmatpush1.msra.mxu0 0.0
    %1340 = vmatprep.subr.mxu0 0.0
    %1341 = vmatpush1.msra.mxu0 0.0
    %1342 = vmatprep.subr.mxu0 0.0
    %1343 = vmatpush1.msra.mxu0 0.0
    %1344 = vmatprep.subr.mxu0 0.0
    %1345 = vmatpush1.msra.mxu0 0.0
    %1346 = vmatprep.subr.mxu0 0.0
    %1347 = vmatpush1.msra.mxu0 0.0
    %1348 = vmatprep.subr.mxu0 0.0
    %1349 = vmatpush1.msra.mxu0 0.0
    %1350 = vmatprep.subr.mxu0 0.0
    %1351 = vmatpush1.msra.mxu0 0.0
    %1352 = vmatprep.subr.mxu0 0.0
    %1353 = vmatpush1.msra.mxu0 0.0
    %1354 = vmatprep.subr.mxu0 0.0
    %1355 = vmatpush1.msra.mxu0 0.0
    %1356 = vmatprep.subr.mxu0 0.0
    %1357 = vmatpush1.msra.mxu0 0.0
    %1358 = vmatprep.subr.mxu0 0.0
    %1359 = vmatpush1.msra.mxu0 0.0
    %1360 = vmatprep.subr.mxu0 0.0
    %1361 = vmatpush1.msra.mxu0 0.0
    %1362 = vmatprep.subr.mxu0 0.0
    %1363 = vmatpush1.msra.mxu0 0.0
    %1364 = vmatprep.subr.mxu0 0.0
    %1365 = vmatpush1.msra.mxu0 0.0
    %1366 = vmatprep.subr.mxu0 0.0
    %1367 = vmatpush1.msra.mxu0 0.0
    %1368 = vmatprep.subr.mxu0 0.0
    %1369 = vmatpush1.msra.mxu0 0.0
    %1370 = vmatprep.subr.mxu0 0.0
    %1371 = vmatpush1.msra.mxu0 0.0
    %1372 = vmatprep.subr.mxu0 0.0
    %1373 = vmatpush1.msra.mxu0 0.0
    %1374 = vmatprep.subr.mxu0 0.0
    %1375 = vmatpush1.msra.mxu0 0.0
    %1376 = vmatprep.subr.mxu0 0.0
    %1377 = vmatpush1.msra.mxu0 0.0
    %1378 = vmatprep.subr.mxu0 0.0
    %1379 = vmatpush1.msra.mxu0 0.0
    %1380 = vmatprep.subr.mxu0 0.0
    %1381 = vmatpush1.msra.mxu0 0.0
    %1382 = vmatprep.subr.mxu0 0.0
    %1383 = vmatpush1.msra.mxu0 0.0
    %1384 = vmatprep.subr.mxu0 0.0
    %1385 = vmatpush1.msra.mxu0 0.0
    %1386 = vmatprep.mubr.f32.mxu0 0.0
    %1387 = vmatmul.mubr.f32.gmra.mrb[0].mxu0 %v911
    %v1388 = vpop.f32.mrb[0].mxu0
    %v1389 = vadd.f32 %v638, %v1388
    %v1390 = vpop.f32.mrb[0].mxu0
    %v1391 = vadd.f32 %v638, %v1390
    %1392 = vmatprep.mubr.f32.mxu0 0.0
    %1393 = vmatmul.mubr.f32.gmra.mrb[0].mxu0 %v914
    %v1394 = vpop.f32.mrb[0].mxu0
    %v1395 = vadd.f32 %v642, %v1394
    %v1396 = vpop.f32.mrb[0].mxu0
    %v1397 = vadd.f32 %v642, %v1396
    %1398 = vmatprep.mubr.f32.mxu0 0.0
    %1399 = vmatmul.mubr.f32.gmra.mrb[0].mxu0 %v917
    %v1400 = vpop.f32.mrb[0].mxu0
    %v1401 = vadd.f32 %v646, %v1400
    %v1402 = vpop.f32.mrb[0].mxu0
    %v1403 = vadd.f32 %v646, %v1402
    %1404 = vmatprep.mubr.f32.mxu0 0.0
    %1405 = vmatmul.mubr.f32.gmra.mrb[0].mxu0 %v920
    %v1406 = vpop.f32.mrb[0].mxu0
    %v1407 = vadd.f32 %v650, %v1406
    %v1408 = vpop.f32.mrb[0].mxu0
    %v1409 = vadd.f32 %v650, %v1408
    %1410 = vdwg.mxu0
    %v1411 = vmax.f32 %v1389, 0.0
    %v1412 = vmax.f32 %v1391, 0.0
    %v1413 = vmax.f32 %v1395, 0.0
    %v1414 = vmax.f32 %v1397, 0.0
    %v1415 = vmax.f32 %v1401, 0.0
    %v1416 = vmax.f32 %v1403, 0.0
    %v1417 = vmax.f32 %v1407, 0.0
    %v1418 = vmax.f32 %v1409, 0.0
    %1419 = vmatprep.subr.mxu0 %v1412
    %1420 = vmatpush1.msra.mxu0 %v1411
    %1421 = vmatprep.subr.mxu0 %v1414
    %1422 = vmatpush1.msra.mxu0 %v1413
    %1423 = vmatprep.subr.mxu0 %v1416
    %1424 = vmatpush1.msra.mxu0 %v1415
    %1425 = vmatprep.subr.mxu0 %v1418
    %1426 = vmatpush1.msra.mxu0 %v1417
    %1427 = vmatprep.subr.mxu0 0.0
    %1428 = vmatpush1.msra.mxu0 0.0
    %1429 = vmatprep.subr.mxu0 0.0
    %1430 = vmatpush1.msra.mxu0 0.0
    %1431 = vmatprep.subr.mxu0 0.0
    %1432 = vmatpush1.msra.mxu0 0.0
    %1433 = vmatprep.subr.mxu0 0.0
    %1434 = vmatpush1.msra.mxu0 0.0
    %1435 = vmatprep.subr.mxu0 0.0
    %1436 = vmatpush1.msra.mxu0 0.0
    %1437 = vmatprep.subr.mxu0 0.0
    %1438 = vmatpush1.msra.mxu0 0.0
    %1439 = vmatprep.subr.mxu0 0.0
    %1440 = vmatpush1.msra.mxu0 0.0
    %1441 = vmatprep.subr.mxu0 0.0
    %1442 = vmatpush1.msra.mxu0 0.0
    %1443 = vmatprep.subr.mxu0 0.0
    %1444 = vmatpush1.msra.mxu0 0.0
    %1445 = vmatprep.subr.mxu0 0.0
    %1446 = vmatpush1.msra.mxu0 0.0
    %1447 = vmatprep.subr.mxu0 0.0
    %1448 = vmatpush1.msra.mxu0 0.0
    %1449 = vmatprep.subr.mxu0 0.0
    %1450 = vmatpush1.msra.mxu0 0.0
    %1451 = vmatprep.subr.mxu0 0.0
    %1452 = vmatpush1.msra.mxu0 0.0
    %1453 = vmatprep.subr.mxu0 0.0
    %1454 = vmatpush1.msra.mxu0 0.0
    %1455 = vmatprep.subr.mxu0 0.0
    %1456 = vmatpush1.msra.mxu0 0.0
    %1457 = vmatprep.subr.mxu0 0.0
    %1458 = vmatpush1.msra.mxu0 0.0
    %1459 = vmatprep.subr.mxu0 0.0
    %1460 = vmatpush1.msra.mxu0 0.0
    %1461 = vmatprep.subr.mxu0 0.0
    %1462 = vmatpush1.msra.mxu0 0.0
    %1463 = vmatprep.subr.mxu0 0.0
    %1464 = vmatpush1.msra.mxu0 0.0
    %1465 = vmatprep.subr.mxu0 0.0
    %1466 = vmatpush1.msra.mxu0 0.0
    %1467 = vmatprep.subr.mxu0 0.0
    %1468 = vmatpush1.msra.mxu0 0.0
    %1469 = vmatprep.subr.mxu0 0.0
    %1470 = vmatpush1.msra.mxu0 0.0
    %1471 = vmatprep.subr.mxu0 0.0
    %1472 = vmatpush1.msra.mxu0 0.0
    %1473 = vmatprep.subr.mxu0 0.0
    %1474 = vmatpush1.msra.mxu0 0.0
    %1475 = vmatprep.subr.mxu0 0.0
    %1476 = vmatpush1.msra.mxu0 0.0
    %1477 = vmatprep.subr.mxu0 0.0
    %1478 = vmatpush1.msra.mxu0 0.0
    %1479 = vmatprep.subr.mxu0 0.0
    %1480 = vmatpush1.msra.mxu0 0.0
    %1481 = vmatprep.subr.mxu0 0.0
    %1482 = vmatpush1.msra.mxu0 0.0
    %1483 = vmatprep.mubr.f32.mxu0 0.0
    %1484 = vmatmul.mubr.f32.gmra.mrb[0].mxu0 %v1020
    %v1485 = vpop.f32.mrb[0].mxu0
    %v1486 = vadd.f32 %v654, %v1485
    %v1487 = vpop.f32.mrb[0].mxu0
    %v1488 = vadd.f32 %v654, %v1487
    %1489 = vmatprep.mubr.f32.mxu0 0.0
    %1490 = vmatmul.mubr.f32.gmra.mrb[0].mxu0 %v1023
    %v1491 = vpop.f32.mrb[0].mxu0
    %v1492 = vadd.f32 %v658, %v1491
    %v1493 = vpop.f32.mrb[0].mxu0
    %v1494 = vadd.f32 %v658, %v1493
    %1495 = vmatprep.mubr.f32.mxu0 0.0
    %1496 = vmatmul.mubr.f32.gmra.mrb[0].mxu0 %v1026
    %v1497 = vpop.f32.mrb[0].mxu0
    %v1498 = vadd.f32 %v662, %v1497
    %v1499 = vpop.f32.mrb[0].mxu0
    %v1500 = vadd.f32 %v662, %v1499
    %1501 = vmatprep.mubr.f32.mxu0 0.0
    %1502 = vmatmul.mubr.f32.gmra.mrb[0].mxu0 %v1029
    %v1503 = vpop.f32.mrb[0].mxu0
    %v1504 = vadd.f32 %v666, %v1503
    %v1505 = vpop.f32.mrb[0].mxu0
    %v1506 = vadd.f32 %v666, %v1505
    %1507 = vdwg.mxu0
    %v1508 = vadd.f32 %v703, %v1486
    %v1509 = vadd.f32 %v704, %v1488
    %v1510 = vadd.f32 %v705, %v1492
    %v1511 = vadd.f32 %v706, %v1494
    %v1512 = vadd.f32 %v707, %v1498
    %v1513 = vadd.f32 %v708, %v1500
    %v1514 = vadd.f32 %v709, %v1504
    %v1515 = vadd.f32 %v710, %v1506
    %v1516 = vmax.f32 %v1508, 0.0
    %v1517 = vmax.f32 %v1509, 0.0
    %v1518 = vmax.f32 %v1510, 0.0
    %v1519 = vmax.f32 %v1511, 0.0
    %v1520 = vmax.f32 %v1512, 0.0
    %v1521 = vmax.f32 %v1513, 0.0
    %v1522 = vmax.f32 %v1514, 0.0
    %v1523 = vmax.f32 %v1515, 0.0
    %1524 = vmatprep.subr.mxu0 %v1517
    %1525 = vmatpush1.msra.mxu0 %v1516
    %1526 = vmatprep.subr.mxu0 %v1519
    %1527 = vmatpush1.msra.mxu0 %v1518
    %1528 = vmatprep.subr.mxu0 %v1521
    %1529 = vmatpush1.msra.mxu0 %v1520
    %1530 = vmatprep.subr.mxu0 %v1523
    %1531 = vmatpush1.msra.mxu0 %v1522
    %1532 = vmatprep.subr.mxu0 0.0
    %1533 = vmatpush1.msra.mxu0 0.0
    %1534 = vmatprep.subr.mxu0 0.0
    %1535 = vmatpush1.msra.mxu0 0.0
    %1536 = vmatprep.subr.mxu0 0.0
    %1537 = vmatpush1.msra.mxu0 0.0
    %1538 = vmatprep.subr.mxu0 0.0
    %1539 = vmatpush1.msra.mxu0 0.0
    %1540 = vmatprep.subr.mxu0 0.0
    %1541 = vmatpush1.msra.mxu0 0.0
    %1542 = vmatprep.subr.mxu0 0.0
    %1543 = vmatpush1.msra.mxu0 0.0
    %1544 = vmatprep.subr.mxu0 0.0
    %1545 = vmatpush1.msra.mxu0 0.0
    %1546 = vmatprep.subr.mxu0 0.0
    %1547 = vmatpush1.msra.mxu0 0.0
    %1548 = vmatprep.subr.mxu0 0.0
    %1549 = vmatpush1.msra.mxu0 0.0
    %1550 = vmatprep.subr.mxu0 0.0
    %1551 = vmatpush1.msra.mxu0 0.0
    %1552 = vmatprep.subr.mxu0 0.0
    %1553 = vmatpush1.msra.mxu0 0.0
    %1554 = vmatprep.subr.mxu0 0.0
    %1555 = vmatpush1.msra.mxu0 0.0
    %1556 = vmatprep.subr.mxu0 0.0
    %1557 = vmatpush1.msra.mxu0 0.0
    %1558 = vmatprep.subr.mxu0 0.0
    %1559 = vmatpush1.msra.mxu0 0.0
    %1560 = vmatprep.subr.mxu0 0.0
    %1561 = vmatpush1.msra.mxu0 0.0
    %1562 = vmatprep.subr.mxu0 0.0
    %1563 = vmatpush1.msra.mxu0 0.0
    %1564 = vmatprep.subr.mxu0 0.0
    %1565 = vmatpush1.msra.mxu0 0.0
    %1566 = vmatprep.subr.mxu0 0.0
    %1567 = vmatpush1.msra.mxu0 0.0
    %1568 = vmatprep.subr.mxu0 0.0
    %1569 = vmatpush1.msra.mxu0 0.0
    %1570 = vmatprep.subr.mxu0 0.0
    %1571 = vmatpush1.msra.mxu0 0.0
    %1572 = vmatprep.subr.mxu0 0.0
    %1573 = vmatpush1.msra.mxu0 0.0
    %1574 = vmatprep.subr.mxu0 0.0
    %1575 = vmatpush1.msra.mxu0 0.0
    %1576 = vmatprep.subr.mxu0 0.0
    %1577 = vmatpush1.msra.mxu0 0.0
    %1578 = vmatprep.subr.mxu0 0.0
    %1579 = vmatpush1.msra.mxu0 0.0
    %1580 = vmatprep.subr.mxu0 0.0
    %1581 = vmatpush1.msra.mxu0 0.0
    %1582 = vmatprep.subr.mxu0 0.0
    %1583 = vmatpush1.msra.mxu0 0.0
    %1584 = vmatprep.subr.mxu0 0.0
    %1585 = vmatpush1.msra.mxu0 0.0
    %1586 = vmatprep.subr.mxu0 0.0
    %1587 = vmatpush1.msra.mxu0 0.0
    %1588 = vmatprep.mubr.f32.mxu0 0.0
    %1589 = vmatmul.mubr.f32.gmra.mrb[0].mxu0 %v713
    %v1590 = vpop.f32.mrb[0].mxu0
    %v1591 = vadd.f32 %v619, %v1590
    %v1592 = vpop.f32.mrb[0].mxu0
    %v1593 = vadd.f32 %v619, %v1592
    %1594 = vmatprep.mubr.f32.mxu0 0.0
    %1595 = vmatmul.mubr.f32.gmra.mrb[0].mxu0 %v716
    %v1596 = vpop.f32.mrb[0].mxu0
    %v1597 = vadd.f32 %v624, %v1596
    %v1598 = vpop.f32.mrb[0].mxu0
    %v1599 = vadd.f32 %v624, %v1598
    %1600 = vmatprep.mubr.f32.mxu0 0.0
    %1601 = vmatmul.mubr.f32.gmra.mrb[0].mxu0 %v719
    %v1602 = vpop.f32.mrb[0].mxu0
    %v1603 = vadd.f32 %v629, %v1602
    %v1604 = vpop.f32.mrb[0].mxu0
    %v1605 = vadd.f32 %v629, %v1604
    %1606 = vmatprep.mubr.f32.mxu0 0.0
    %1607 = vmatmul.mubr.f32.gmra.mrb[0].mxu0 %v722
    %v1608 = vpop.f32.mrb[0].mxu0
    %v1609 = vadd.f32 %v634, %v1608
    %v1610 = vpop.f32.mrb[0].mxu0
    %v1611 = vadd.f32 %v634, %v1610
    %1612 = vdwg.mxu0
    %v1613 = vmax.f32 %v1591, 0.0
    %v1614 = vmax.f32 %v1593, 0.0
    %v1615 = vmax.f32 %v1597, 0.0
    %v1616 = vmax.f32 %v1599, 0.0
    %v1617 = vmax.f32 %v1603, 0.0
    %v1618 = vmax.f32 %v1605, 0.0
    %v1619 = vmax.f32 %v1609, 0.0
    %v1620 = vmax.f32 %v1611, 0.0
    %1621 = vmatprep.subr.mxu0 %v535
    %1622 = vmatpush1.msra.mxu0 %v534
    %1623 = vmatprep.subr.mxu0 %v537
    %1624 = vmatpush1.msra.mxu0 %v536
    %1625 = vmatprep.subr.mxu0 %v539
    %1626 = vmatpush1.msra.mxu0 %v538
    %1627 = vmatprep.subr.mxu0 %v541
    %1628 = vmatpush1.msra.mxu0 %v540
    %1629 = vmatprep.subr.mxu0 %v543
    %1630 = vmatpush1.msra.mxu0 %v542
    %1631 = vmatprep.subr.mxu0 %v545
    %1632 = vmatpush1.msra.mxu0 %v544
    %1633 = vmatprep.subr.mxu0 %v547
    %1634 = vmatpush1.msra.mxu0 %v546
    %1635 = vmatprep.subr.mxu0 %v549
    %1636 = vmatpush1.msra.mxu0 %v548
    %1637 = vmatprep.subr.mxu0 %v551
    %1638 = vmatpush1.msra.mxu0 %v550
    %1639 = vmatprep.subr.mxu0 %v553
    %1640 = vmatpush1.msra.mxu0 %v552
    %1641 = vmatprep.subr.mxu0 %v555
    %1642 = vmatpush1.msra.mxu0 %v554
    %1643 = vmatprep.subr.mxu0 %v557
    %1644 = vmatpush1.msra.mxu0 %v556
    %1645 = vmatprep.subr.mxu0 %v559
    %1646 = vmatpush1.msra.mxu0 %v558
    %1647 = vmatprep.subr.mxu0 %v561
    %1648 = vmatpush1.msra.mxu0 %v560
    %1649 = vmatprep.subr.mxu0 %v563
    %1650 = vmatpush1.msra.mxu0 %v562
    %1651 = vmatprep.subr.mxu0 %v565
    %1652 = vmatpush1.msra.mxu0 %v564
    %1653 = vmatprep.subr.mxu0 %v567
    %1654 = vmatpush1.msra.mxu0 %v566
    %1655 = vmatprep.subr.mxu0 %v569
    %1656 = vmatpush1.msra.mxu0 %v568
    %1657 = vmatprep.subr.mxu0 %v571
    %1658 = vmatpush1.msra.mxu0 %v570
    %1659 = vmatprep.subr.mxu0 %v573
    %1660 = vmatpush1.msra.mxu0 %v572
    %1661 = vmatprep.subr.mxu0 %v575
    %1662 = vmatpush1.msra.mxu0 %v574
    %1663 = vmatprep.subr.mxu0 %v577
    %1664 = vmatpush1.msra.mxu0 %v576
    %1665 = vmatprep.subr.mxu0 %v579
    %1666 = vmatpush1.msra.mxu0 %v578
    %1667 = vmatprep.subr.mxu0 %v581
    %1668 = vmatpush1.msra.mxu0 %v580
    %1669 = vmatprep.subr.mxu0 %v583
    %1670 = vmatpush1.msra.mxu0 %v582
    %1671 = vmatprep.subr.mxu0 %v585
    %1672 = vmatpush1.msra.mxu0 %v584
    %1673 = vmatprep.subr.mxu0 %v587
    %1674 = vmatpush1.msra.mxu0 %v586
    %1675 = vmatprep.subr.mxu0 %v589
    %1676 = vmatpush1.msra.mxu0 %v588
    %1677 = vmatprep.subr.mxu0 %v591
    %1678 = vmatpush1.msra.mxu0 %v590
    %1679 = vmatprep.subr.mxu0 %v593
    %1680 = vmatpush1.msra.mxu0 %v592
    %1681 = vmatprep.subr.mxu0 %v595
    %1682 = vmatpush1.msra.mxu0 %v594
    %1683 = vmatprep.subr.mxu0 %v597
    %1684 = vmatpush1.msra.mxu0 %v596
    %1685 = vmatprep.mubr.f32.mxu0 %v1614
    %1686 = vmatmul.mubr.f32.gmra.mrb[0].mxu0 %v1613
    %v1687 = vpop.f32.mrb[0].mxu0
    %v1688 = vadd.f32 0.0, %v1687
    %v1689 = vpop.f32.mrb[0].mxu0
    %v1690 = vadd.f32 0.0, %v1689
    %1691 = vmatprep.mubr.f32.mxu0 %v1616
    %1692 = vmatmul.mubr.f32.gmra.mrb[0].mxu0 %v1615
    %v1693 = vpop.f32.mrb[0].mxu0
    %v1694 = vadd.f32 0.0, %v1693
    %v1695 = vpop.f32.mrb[0].mxu0
    %v1696 = vadd.f32 0.0, %v1695
    %1697 = vmatprep.mubr.f32.mxu0 %v1618
    %1698 = vmatmul.mubr.f32.gmra.mrb[0].mxu0 %v1617
    %v1699 = vpop.f32.mrb[0].mxu0
    %v1700 = vadd.f32 0.0, %v1699
    %v1701 = vpop.f32.mrb[0].mxu0
    %v1702 = vadd.f32 0.0, %v1701
    %1703 = vmatprep.mubr.f32.mxu0 %v1620
    %1704 = vmatmul.mubr.f32.gmra.mrb[0].mxu0 %v1619
    %v1705 = vpop.f32.mrb[0].mxu0
    %v1706 = vadd.f32 0.0, %v1705
    %v1707 = vpop.f32.mrb[0].mxu0
    %v1708 = vadd.f32 0.0, %v1707
    %1709 = vdwg.mxu0
    %1710 = vmatprep.subr.mxu0 %v1690
    %1711 = vmatpush1.msra.mxu0 %v1688
    %1712 = vmatprep.subr.mxu0 %v1696
    %1713 = vmatpush1.msra.mxu0 %v1694
    %1714 = vmatprep.subr.mxu0 %v1702
    %1715 = vmatpush1.msra.mxu0 %v1700
    %1716 = vmatprep.subr.mxu0 %v1708
    %1717 = vmatpush1.msra.mxu0 %v1706
    %1718 = vmatprep.subr.mxu0 0.0
    %1719 = vmatpush1.msra.mxu0 0.0
    %1720 = vmatprep.subr.mxu0 0.0
    %1721 = vmatpush1.msra.mxu0 0.0
    %1722 = vmatprep.subr.mxu0 0.0
    %1723 = vmatpush1.msra.mxu0 0.0
    %1724 = vmatprep.subr.mxu0 0.0
    %1725 = vmatpush1.msra.mxu0 0.0
    %1726 = vmatprep.subr.mxu0 0.0
    %1727 = vmatpush1.msra.mxu0 0.0
    %1728 = vmatprep.subr.mxu0 0.0
    %1729 = vmatpush1.msra.mxu0 0.0
    %1730 = vmatprep.subr.mxu0 0.0
    %1731 = vmatpush1.msra.mxu0 0.0
    %1732 = vmatprep.subr.mxu0 0.0
    %1733 = vmatpush1.msra.mxu0 0.0
    %1734 = vmatprep.subr.mxu0 0.0
    %1735 = vmatpush1.msra.mxu0 0.0
    %1736 = vmatprep.subr.mxu0 0.0
    %1737 = vmatpush1.msra.mxu0 0.0
    %1738 = vmatprep.subr.mxu0 0.0
    %1739 = vmatpush1.msra.mxu0 0.0
    %1740 = vmatprep.subr.mxu0 0.0
    %1741 = vmatpush1.msra.mxu0 0.0
    %1742 = vmatprep.subr.mxu0 0.0
    %1743 = vmatpush1.msra.mxu0 0.0
    %1744 = vmatprep.subr.mxu0 0.0
    %1745 = vmatpush1.msra.mxu0 0.0
    %1746 = vmatprep.subr.mxu0 0.0
    %1747 = vmatpush1.msra.mxu0 0.0
    %1748 = vmatprep.subr.mxu0 0.0
    %1749 = vmatpush1.msra.mxu0 0.0
    %1750 = vmatprep.subr.mxu0 0.0
    %1751 = vmatpush1.msra.mxu0 0.0
    %1752 = vmatprep.subr.mxu0 0.0
    %1753 = vmatpush1.msra.mxu0 0.0
    %1754 = vmatprep.subr.mxu0 0.0
    %1755 = vmatpush1.msra.mxu0 0.0
    %1756 = vmatprep.subr.mxu0 0.0
    %1757 = vmatpush1.msra.mxu0 0.0
    %1758 = vmatprep.subr.mxu0 0.0
    %1759 = vmatpush1.msra.mxu0 0.0
    %1760 = vmatprep.subr.mxu0 0.0
    %1761 = vmatpush1.msra.mxu0 0.0
    %1762 = vmatprep.subr.mxu0 0.0
    %1763 = vmatpush1.msra.mxu0 0.0
    %1764 = vmatprep.subr.mxu0 0.0
    %1765 = vmatpush1.msra.mxu0 0.0
    %1766 = vmatprep.subr.mxu0 0.0
    %1767 = vmatpush1.msra.mxu0 0.0
    %1768 = vmatprep.subr.mxu0 0.0
    %1769 = vmatpush1.msra.mxu0 0.0
    %1770 = vmatprep.subr.mxu0 0.0
    %1771 = vmatpush1.msra.mxu0 0.0
    %1772 = vmatprep.subr.mxu0 0.0
    %1773 = vmatpush1.msra.mxu0 0.0
    %1774 = vmatprep.mubr.f32.mxu0 0.0
    %1775 = vmatmul.mubr.f32.gmra.mrb[0].mxu0 %v911
    %v1776 = vpop.f32.mrb[0].mxu0
    %v1777 = vadd.f32 %v638, %v1776
    %v1778 = vpop.f32.mrb[0].mxu0
    %v1779 = vadd.f32 %v638, %v1778
    %1780 = vmatprep.mubr.f32.mxu0 0.0
    %1781 = vmatmul.mubr.f32.gmra.mrb[0].mxu0 %v914
    %v1782 = vpop.f32.mrb[0].mxu0
    %v1783 = vadd.f32 %v642, %v1782
    %v1784 = vpop.f32.mrb[0].mxu0
    %v1785 = vadd.f32 %v642, %v1784
    %1786 = vmatprep.mubr.f32.mxu0 0.0
    %1787 = vmatmul.mubr.f32.gmra.mrb[0].mxu0 %v917
    %v1788 = vpop.f32.mrb[0].mxu0
    %v1789 = vadd.f32 %v646, %v1788
    %v1790 = vpop.f32.mrb[0].mxu0
    %v1791 = vadd.f32 %v646, %v1790
    %1792 = vmatprep.mubr.f32.mxu0 0.0
    %1793 = vmatmul.mubr.f32.gmra.mrb[0].mxu0 %v920
    %v1794 = vpop.f32.mrb[0].mxu0
    %v1795 = vadd.f32 %v650, %v1794
    %v1796 = vpop.f32.mrb[0].mxu0
    %v1797 = vadd.f32 %v650, %v1796
    %1798 = vdwg.mxu0
    %v1799 = vmax.f32 %v1777, 0.0
    %v1800 = vmax.f32 %v1779, 0.0
    %v1801 = vmax.f32 %v1783, 0.0
    %v1802 = vmax.f32 %v1785, 0.0
    %v1803 = vmax.f32 %v1789, 0.0
    %v1804 = vmax.f32 %v1791, 0.0
    %v1805 = vmax.f32 %v1795, 0.0
    %v1806 = vmax.f32 %v1797, 0.0
    %1807 = vmatprep.subr.mxu0 %v1800
    %1808 = vmatpush1.msra.mxu0 %v1799
    %1809 = vmatprep.subr.mxu0 %v1802
    %1810 = vmatpush1.msra.mxu0 %v1801
    %1811 = vmatprep.subr.mxu0 %v1804
    %1812 = vmatpush1.msra.mxu0 %v1803
    %1813 = vmatprep.subr.mxu0 %v1806
    %1814 = vmatpush1.msra.mxu0 %v1805
    %1815 = vmatprep.subr.mxu0 0.0
    %1816 = vmatpush1.msra.mxu0 0.0
    %1817 = vmatprep.subr.mxu0 0.0
    %1818 = vmatpush1.msra.mxu0 0.0
    %1819 = vmatprep.subr.mxu0 0.0
    %1820 = vmatpush1.msra.mxu0 0.0
    %1821 = vmatprep.subr.mxu0 0.0
    %1822 = vmatpush1.msra.mxu0 0.0
    %1823 = vmatprep.subr.mxu0 0.0
    %1824 = vmatpush1.msra.mxu0 0.0
    %1825 = vmatprep.subr.mxu0 0.0
    %1826 = vmatpush1.msra.mxu0 0.0
    %1827 = vmatprep.subr.mxu0 0.0
    %1828 = vmatpush1.msra.mxu0 0.0
    %1829 = vmatprep.subr.mxu0 0.0
    %1830 = vmatpush1.msra.mxu0 0.0
    %1831 = vmatprep.subr.mxu0 0.0
    %1832 = vmatpush1.msra.mxu0 0.0
    %1833 = vmatprep.subr.mxu0 0.0
    %1834 = vmatpush1.msra.mxu0 0.0
    %1835 = vmatprep.subr.mxu0 0.0
    %1836 = vmatpush1.msra.mxu0 0.0
    %1837 = vmatprep.subr.mxu0 0.0
    %1838 = vmatpush1.msra.mxu0 0.0
    %1839 = vmatprep.subr.mxu0 0.0
    %1840 = vmatpush1.msra.mxu0 0.0
    %1841 = vmatprep.subr.mxu0 0.0
    %1842 = vmatpush1.msra.mxu0 0.0
    %1843 = vmatprep.subr.mxu0 0.0
    %1844 = vmatpush1.msra.mxu0 0.0
    %1845 = vmatprep.subr.mxu0 0.0
    %1846 = vmatpush1.msra.mxu0 0.0
    %1847 = vmatprep.subr.mxu0 0.0
    %1848 = vmatpush1.msra.mxu0 0.0
    %1849 = vmatprep.subr.mxu0 0.0
    %1850 = vmatpush1.msra.mxu0 0.0
    %1851 = vmatprep.subr.mxu0 0.0
    %1852 = vmatpush1.msra.mxu0 0.0
    %1853 = vmatprep.subr.mxu0 0.0
    %1854 = vmatpush1.msra.mxu0 0.0
    %1855 = vmatprep.subr.mxu0 0.0
    %1856 = vmatpush1.msra.mxu0 0.0
    %1857 = vmatprep.subr.mxu0 0.0
    %1858 = vmatpush1.msra.mxu0 0.0
    %1859 = vmatprep.subr.mxu0 0.0
    %1860 = vmatpush1.msra.mxu0 0.0
    %1861 = vmatprep.subr.mxu0 0.0
    %1862 = vmatpush1.msra.mxu0 0.0
    %1863 = vmatprep.subr.mxu0 0.0
    %1864 = vmatpush1.msra.mxu0 0.0
    %1865 = vmatprep.subr.mxu0 0.0
    %1866 = vmatpush1.msra.mxu0 0.0
    %1867 = vmatprep.subr.mxu0 0.0
    %1868 = vmatpush1.msra.mxu0 0.0
    %1869 = vmatprep.subr.mxu0 0.0
    %1870 = vmatpush1.msra.mxu0 0.0
    %1871 = vmatprep.mubr.f32.mxu0 0.0
    %1872 = vmatmul.mubr.f32.gmra.mrb[0].mxu0 %v1020
    %v1873 = vpop.f32.mrb[0].mxu0
    %v1874 = vadd.f32 %v654, %v1873
    %v1875 = vpop.f32.mrb[0].mxu0
    %v1876 = vadd.f32 %v654, %v1875
    %1877 = vmatprep.mubr.f32.mxu0 0.0
    %1878 = vmatmul.mubr.f32.gmra.mrb[0].mxu0 %v1023
    %v1879 = vpop.f32.mrb[0].mxu0
    %v1880 = vadd.f32 %v658, %v1879
    %v1881 = vpop.f32.mrb[0].mxu0
    %v1882 = vadd.f32 %v658, %v1881
    %1883 = vmatprep.mubr.f32.mxu0 0.0
    %1884 = vmatmul.mubr.f32.gmra.mrb[0].mxu0 %v1026
    %v1885 = vpop.f32.mrb[0].mxu0
    %v1886 = vadd.f32 %v662, %v1885
    %v1887 = vpop.f32.mrb[0].mxu0
    %v1888 = vadd.f32 %v662, %v1887
    %1889 = vmatprep.mubr.f32.mxu0 0.0
    %1890 = vmatmul.mubr.f32.gmra.mrb[0].mxu0 %v1029
    %v1891 = vpop.f32.mrb[0].mxu0
    %v1892 = vadd.f32 %v666, %v1891
    %v1893 = vpop.f32.mrb[0].mxu0
    %v1894 = vadd.f32 %v666, %v1893
    %1895 = vdwg.mxu0
    %v1896 = vadd.f32 %v703, %v1874
    %v1897 = vadd.f32 %v704, %v1876
    %v1898 = vadd.f32 %v705, %v1880
    %v1899 = vadd.f32 %v706, %v1882
    %v1900 = vadd.f32 %v707, %v1886
    %v1901 = vadd.f32 %v708, %v1888
    %v1902 = vadd.f32 %v709, %v1892
    %v1903 = vadd.f32 %v710, %v1894
    %v1904 = vmax.f32 %v1896, 0.0
    %v1905 = vmax.f32 %v1897, 0.0
    %v1906 = vmax.f32 %v1898, 0.0
    %v1907 = vmax.f32 %v1899, 0.0
    %v1908 = vmax.f32 %v1900, 0.0
    %v1909 = vmax.f32 %v1901, 0.0
    %v1910 = vmax.f32 %v1902, 0.0
    %v1911 = vmax.f32 %v1903, 0.0
    %v1912 = vmul.f32 %v1904, %v688
    %v1913 = vmul.f32 %v1905, %v692
    %v1914 = vmul.f32 %v1906, %v688
    %v1915 = vmul.f32 %v1907, %v692
    %v1916 = vmul.f32 %v1908, %v688
    %v1917 = vmul.f32 %v1909, %v692
    %v1918 = vmul.f32 %v1910, %v688
    %v1919 = vmul.f32 %v1911, %v692
    %v1920 = vld [vmem:[%s4] sm:$0xff]
    %v1921 = vld [vmem:[%s4 + $0x8] sm:$0xff]
    %v1922 = vld [vmem:[%s4 + $0x10] sm:$0xff]
    %v1923 = vld [vmem:[%s4 + $0x18] sm:$0xff]
    %v1924 = vld [vmem:[%s4 + $0x20] sm:$0xff]
    %v1925 = vld [vmem:[%s4 + $0x28] sm:$0xff]
    %v1926 = vld [vmem:[%s4 + $0x30] sm:$0xff]
    %v1927 = vld [vmem:[%s4 + $0x38] sm:$0xff]
    %v1928 = vld [vmem:[%s4 + $0x40] sm:$0xff]
    %v1929 = vld [vmem:[%s4 + $0x48] sm:$0xff]
    %v1930 = vld [vmem:[%s4 + $0x50] sm:$0xff]
    %v1931 = vld [vmem:[%s4 + $0x58] sm:$0xff]
    %v1932 = vld [vmem:[%s4 + $0x60] sm:$0xff]
    %v1933 = vld [vmem:[%s4 + $0x68] sm:$0xff]
    %v1934 = vld [vmem:[%s4 + $0x70] sm:$0xff]
    %v1935 = vld [vmem:[%s4 + $0x78] sm:$0xff]
    %v1936 = vld [vmem:[%s4 + $0x80] sm:$0xff]
    %v1937 = vld [vmem:[%s4 + $0x88] sm:$0xff]
    %v1938 = vld [vmem:[%s4 + $0x90] sm:$0xff]
    %v1939 = vld [vmem:[%s4 + $0x98] sm:$0xff]
    %v1940 = vld [vmem:[%s4 + $0xa0] sm:$0xff]
    %v1941 = vld [vmem:[%s4 + $0xa8] sm:$0xff]
    %v1942 = vld [vmem:[%s4 + $0xb0] sm:$0xff]
    %v1943 = vld [vmem:[%s4 + $0xb8] sm:$0xff]
    %v1944 = vld [vmem:[%s4 + $0xc0] sm:$0xff]
    %v1945 = vld [vmem:[%s4 + $0xc8] sm:$0xff]
    %v1946 = vld [vmem:[%s4 + $0xd0] sm:$0xff]
    %v1947 = vld [vmem:[%s4 + $0xd8] sm:$0xff]
    %v1948 = vld [vmem:[%s4 + $0xe0] sm:$0xff]
    %v1949 = vld [vmem:[%s4 + $0xe8] sm:$0xff]
    %v1950 = vld [vmem:[%s4 + $0xf0] sm:$0xff]
    %v1951 = vld [vmem:[%s4 + $0xf8] sm:$0xff]
    %1952 = vmatprep.subr.mxu0 0.0
    %1953 = vmatpush1.msra.mxu0 %v1920
    %1954 = vmatprep.subr.mxu0 0.0
    %1955 = vmatpush1.msra.mxu0 %v1921
    %1956 = vmatprep.subr.mxu0 0.0
    %1957 = vmatpush1.msra.mxu0 %v1922
    %1958 = vmatprep.subr.mxu0 0.0
    %1959 = vmatpush1.msra.mxu0 %v1923
    %1960 = vmatprep.subr.mxu0 0.0
    %1961 = vmatpush1.msra.mxu0 %v1924
    %1962 = vmatprep.subr.mxu0 0.0
    %1963 = vmatpush1.msra.mxu0 %v1925
    %1964 = vmatprep.subr.mxu0 0.0
    %1965 = vmatpush1.msra.mxu0 %v1926
    %1966 = vmatprep.subr.mxu0 0.0
    %1967 = vmatpush1.msra.mxu0 %v1927
    %1968 = vmatprep.subr.mxu0 0.0
    %1969 = vmatpush1.msra.mxu0 %v1928
    %1970 = vmatprep.subr.mxu0 0.0
    %1971 = vmatpush1.msra.mxu0 %v1929
    %1972 = vmatprep.subr.mxu0 0.0
    %1973 = vmatpush1.msra.mxu0 %v1930
    %1974 = vmatprep.subr.mxu0 0.0
    %1975 = vmatpush1.msra.mxu0 %v1931
    %1976 = vmatprep.subr.mxu0 0.0
    %1977 = vmatpush1.msra.mxu0 %v1932
    %1978 = vmatprep.subr.mxu0 0.0
    %1979 = vmatpush1.msra.mxu0 %v1933
    %1980 = vmatprep.subr.mxu0 0.0
    %1981 = vmatpush1.msra.mxu0 %v1934
    %1982 = vmatprep.subr.mxu0 0.0
    %1983 = vmatpush1.msra.mxu0 %v1935
    %1984 = vmatprep.subr.mxu0 0.0
    %1985 = vmatpush1.msra.mxu0 %v1936
    %1986 = vmatprep.subr.mxu0 0.0
    %1987 = vmatpush1.msra.mxu0 %v1937
    %1988 = vmatprep.subr.mxu0 0.0
    %1989 = vmatpush1.msra.mxu0 %v1938
    %1990 = vmatprep.subr.mxu0 0.0
    %1991 = vmatpush1.msra.mxu0 %v1939
    %1992 = vmatprep.subr.mxu0 0.0
    %1993 = vmatpush1.msra.mxu0 %v1940
    %1994 = vmatprep.subr.mxu0 0.0
    %1995 = vmatpush1.msra.mxu0 %v1941
    %1996 = vmatprep.subr.mxu0 0.0
    %1997 = vmatpush1.msra.mxu0 %v1942
    %1998 = vmatprep.subr.mxu0 0.0
    %1999 = vmatpush1.msra.mxu0 %v1943
    %2000 = vmatprep.subr.mxu0 0.0
    %2001 = vmatpush1.msra.mxu0 %v1944
    %2002 = vmatprep.subr.mxu0 0.0
    %2003 = vmatpush1.msra.mxu0 %v1945
    %2004 = vmatprep.subr.mxu0 0.0
    %2005 = vmatpush1.msra.mxu0 %v1946
    %2006 = vmatprep.subr.mxu0 0.0
    %2007 = vmatpush1.msra.mxu0 %v1947
    %2008 = vmatprep.subr.mxu0 0.0
    %2009 = vmatpush1.msra.mxu0 %v1948
    %2010 = vmatprep.subr.mxu0 0.0
    %2011 = vmatpush1.msra.mxu0 %v1949
    %2012 = vmatprep.subr.mxu0 0.0
    %2013 = vmatpush1.msra.mxu0 %v1950
    %2014 = vmatprep.subr.mxu0 0.0
    %2015 = vmatpush1.msra.mxu0 %v1951
    %2016 = vmatprep.mubr.f32.mxu0 %v1913
    %2017 = vmatmul.mubr.f32.gmra.mrb[0].mxu0 %v1912
    %v2018 = vpop.f32.mrb[0].mxu0
    %v2019 = vadd.f32 0.0, %v2018
    %v2020 = vpop.f32.mrb[0].mxu0
    %2021 = vmatprep.mubr.f32.mxu0 %v1915
    %2022 = vmatmul.mubr.f32.gmra.mrb[0].mxu0 %v1914
    %v2023 = vpop.f32.mrb[0].mxu0
    %v2024 = vadd.f32 0.0, %v2023
    %v2025 = vpop.f32.mrb[0].mxu0
    %2026 = vmatprep.mubr.f32.mxu0 %v1917
    %2027 = vmatmul.mubr.f32.gmra.mrb[0].mxu0 %v1916
    %v2028 = vpop.f32.mrb[0].mxu0
    %v2029 = vadd.f32 0.0, %v2028
    %v2030 = vpop.f32.mrb[0].mxu0
    %2031 = vmatprep.mubr.f32.mxu0 %v1919
    %2032 = vmatmul.mubr.f32.gmra.mrb[0].mxu0 %v1918
    %v2033 = vpop.f32.mrb[0].mxu0
    %v2034 = vadd.f32 0.0, %v2033
    %v2035 = vpop.f32.mrb[0].mxu0
    %2036 = vdwg.mxu0
    %v2037 = vld [vmem:[#allocation9] sm:$0xff]
    %v2038 = vld [vmem:[#allocation9 + $0x8] sm:$0xff]
    %v2039 = vld [vmem:[#allocation9 + $0x10] sm:$0xff]
    %v2040 = vld [vmem:[#allocation9 + $0x18] sm:$0xff]
    %v2041 = vld [vmem:[%s9] sm:$0xff]
    %v2042 = vld [vmem:[%s9 + $0x8] sm:$0xff]
    %v2043 = vld [vmem:[%s9] sm:$0x1]
    %2045 = vset.pattern.permute.xlu0 0
    %2046 = vperm.xlu0 %2045, %v2041
    %v2047 = vpop.permute.xlu0 %2046
    %2050 = vset.pattern.permute.xlu0 0
    %2051 = vperm.xlu0 %2050, %v2042
    %v2052 = vpop.permute.xlu0 %2051
    %v2055 = vsel %vm711, %v2037, 0
    %v2058 = vsel %vm711, %v2038, 0
    %2060 = vmatprep.subr.mxu0 0.0
    %2061 = vmatpush1.msra.mxu0 %v2019
    %2062 = vmatprep.subr.mxu0 0.0
    %2063 = vmatpush1.msra.mxu0 %v2024
    %2064 = vmatprep.subr.mxu0 0.0
    %2065 = vmatpush1.msra.mxu0 %v2029
    %2066 = vmatprep.subr.mxu0 0.0
    %2067 = vmatpush1.msra.mxu0 %v2034
    %2068 = vmatprep.subr.mxu0 0.0
    %2069 = vmatpush1.msra.mxu0 0.0
    %2070 = vmatprep.subr.mxu0 0.0
    %2071 = vmatpush1.msra.mxu0 0.0
    %2072 = vmatprep.subr.mxu0 0.0
    %2073 = vmatpush1.msra.mxu0 0.0
    %2074 = vmatprep.subr.mxu0 0.0
    %2075 = vmatpush1.msra.mxu0 0.0
    %2076 = vmatprep.subr.mxu0 0.0
    %2077 = vmatpush1.msra.mxu0 0.0
    %2078 = vmatprep.subr.mxu0 0.0
    %2079 = vmatpush1.msra.mxu0 0.0
    %2080 = vmatprep.subr.mxu0 0.0
    %2081 = vmatpush1.msra.mxu0 0.0
    %2082 = vmatprep.subr.mxu0 0.0
    %2083 = vmatpush1.msra.mxu0 0.0
    %2084 = vmatprep.subr.mxu0 0.0
    %2085 = vmatpush1.msra.mxu0 0.0
    %2086 = vmatprep.subr.mxu0 0.0
    %2087 = vmatpush1.msra.mxu0 0.0
    %2088 = vmatprep.subr.mxu0 0.0
    %2089 = vmatpush1.msra.mxu0 0.0
    %2090 = vmatprep.subr.mxu0 0.0
    %2091 = vmatpush1.msra.mxu0 0.0
    %2092 = vmatprep.subr.mxu0 0.0
    %2093 = vmatpush1.msra.mxu0 0.0
    %2094 = vmatprep.subr.mxu0 0.0
    %2095 = vmatpush1.msra.mxu0 0.0
    %2096 = vmatprep.subr.mxu0 0.0
    %2097 = vmatpush1.msra.mxu0 0.0
    %2098 = vmatprep.subr.mxu0 0.0
    %2099 = vmatpush1.msra.mxu0 0.0
    %2100 = vmatprep.subr.mxu0 0.0
    %2101 = vmatpush1.msra.mxu0 0.0
    %2102 = vmatprep.subr.mxu0 0.0
    %2103 = vmatpush1.msra.mxu0 0.0
    %2104 = vmatprep.subr.mxu0 0.0
    %2105 = vmatpush1.msra.mxu0 0.0
    %2106 = vmatprep.subr.mxu0 0.0
    %2107 = vmatpush1.msra.mxu0 0.0
    %2108 = vmatprep.subr.mxu0 0.0
    %2109 = vmatpush1.msra.mxu0 0.0
    %2110 = vmatprep.subr.mxu0 0.0
    %2111 = vmatpush1.msra.mxu0 0.0
    %2112 = vmatprep.subr.mxu0 0.0
    %2113 = vmatpush1.msra.mxu0 0.0
    %2114 = vmatprep.subr.mxu0 0.0
    %2115 = vmatpush1.msra.mxu0 0.0
    %2116 = vmatprep.subr.mxu0 0.0
    %2117 = vmatpush1.msra.mxu0 0.0
    %2118 = vmatprep.subr.mxu0 0.0
    %2119 = vmatpush1.msra.mxu0 0.0
    %2120 = vmatprep.subr.mxu0 0.0
    %2121 = vmatpush1.msra.mxu0 0.0
    %2122 = vmatprep.subr.mxu0 0.0
    %2123 = vmatpush1.msra.mxu0 0.0
    %2124 = vmatprep.mubr.f32.mxu0 0.0
    %2125 = vmatmul.mubr.f32.gmra.mrb[0].mxu0 %v2055
    %v2126 = vpop.f32.mrb[0].mxu0
    %v2127 = vadd.f32 %v2047, %v2126
    %v2128 = vpop.f32.mrb[0].mxu0
    %2129 = vmatprep.mubr.f32.mxu0 0.0
    %2130 = vmatmul.mubr.f32.gmra.mrb[0].mxu0 %v2058
    %v2131 = vpop.f32.mrb[0].mxu0
    %v2132 = vadd.f32 %v2052, %v2131
    %v2133 = vpop.f32.mrb[0].mxu0
    %2134 = vdwg.mxu0
    %v2135 = vld [vmem:[#allocation6] sm:$0xff]
    %v2136 = vld [vmem:[#allocation6 + $0x8] sm:$0xff]
    %v2137 = vld [vmem:[#allocation6 + $0x10] sm:$0xff]
    %v2138 = vld [vmem:[#allocation6 + $0x18] sm:$0xff]
    %v2139 = vld [vmem:[#allocation6 + $0x20] sm:$0xff]
    %v2140 = vld [vmem:[#allocation6 + $0x28] sm:$0xff]
    %v2141 = vld [vmem:[#allocation6 + $0x30] sm:$0xff]
    %v2142 = vld [vmem:[#allocation6 + $0x38] sm:$0xff]
    %v2144 = vsel %vm711, %v2039, 0
    %v2147 = vsel %vm711, %v2040, 0
    %2149 = vmatprep.subr.mxu0 %v1905
    %2150 = vmatpush1.msra.mxu0 %v1904
    %2151 = vmatprep.subr.mxu0 %v1907
    %2152 = vmatpush1.msra.mxu0 %v1906
    %2153 = vmatprep.subr.mxu0 %v1909
    %2154 = vmatpush1.msra.mxu0 %v1908
    %2155 = vmatprep.subr.mxu0 %v1911
    %2156 = vmatpush1.msra.mxu0 %v1910
    %2157 = vmatprep.subr.mxu0 0.0
    %2158 = vmatpush1.msra.mxu0 0.0
    %2159 = vmatprep.subr.mxu0 0.0
    %2160 = vmatpush1.msra.mxu0 0.0
    %2161 = vmatprep.subr.mxu0 0.0
    %2162 = vmatpush1.msra.mxu0 0.0
    %2163 = vmatprep.subr.mxu0 0.0
    %2164 = vmatpush1.msra.mxu0 0.0
    %2165 = vmatprep.subr.mxu0 0.0
    %2166 = vmatpush1.msra.mxu0 0.0
    %2167 = vmatprep.subr.mxu0 0.0
    %2168 = vmatpush1.msra.mxu0 0.0
    %2169 = vmatprep.subr.mxu0 0.0
    %2170 = vmatpush1.msra.mxu0 0.0
    %2171 = vmatprep.subr.mxu0 0.0
    %2172 = vmatpush1.msra.mxu0 0.0
    %2173 = vmatprep.subr.mxu0 0.0
    %2174 = vmatpush1.msra.mxu0 0.0
    %2175 = vmatprep.subr.mxu0 0.0
    %2176 = vmatpush1.msra.mxu0 0.0
    %2177 = vmatprep.subr.mxu0 0.0
    %2178 = vmatpush1.msra.mxu0 0.0
    %2179 = vmatprep.subr.mxu0 0.0
    %2180 = vmatpush1.msra.mxu0 0.0
    %2181 = vmatprep.subr.mxu0 0.0
    %2182 = vmatpush1.msra.mxu0 0.0
    %2183 = vmatprep.subr.mxu0 0.0
    %2184 = vmatpush1.msra.mxu0 0.0
    %2185 = vmatprep.subr.mxu0 0.0
    %2186 = vmatpush1.msra.mxu0 0.0
    %2187 = vmatprep.subr.mxu0 0.0
    %2188 = vmatpush1.msra.mxu0 0.0
    %2189 = vmatprep.subr.mxu0 0.0
    %2190 = vmatpush1.msra.mxu0 0.0
    %2191 = vmatprep.subr.mxu0 0.0
    %2192 = vmatpush1.msra.mxu0 0.0
    %2193 = vmatprep.subr.mxu0 0.0
    %2194 = vmatpush1.msra.mxu0 0.0
    %2195 = vmatprep.subr.mxu0 0.0
    %2196 = vmatpush1.msra.mxu0 0.0
    %2197 = vmatprep.subr.mxu0 0.0
    %2198 = vmatpush1.msra.mxu0 0.0
    %2199 = vmatprep.subr.mxu0 0.0
    %2200 = vmatpush1.msra.mxu0 0.0
    %2201 = vmatprep.subr.mxu0 0.0
    %2202 = vmatpush1.msra.mxu0 0.0
    %2203 = vmatprep.subr.mxu0 0.0
    %2204 = vmatpush1.msra.mxu0 0.0
    %2205 = vmatprep.subr.mxu0 0.0
    %2206 = vmatpush1.msra.mxu0 0.0
    %2207 = vmatprep.subr.mxu0 0.0
    %2208 = vmatpush1.msra.mxu0 0.0
    %2209 = vmatprep.subr.mxu0 0.0
    %2210 = vmatpush1.msra.mxu0 0.0
    %2211 = vmatprep.subr.mxu0 0.0
    %2212 = vmatpush1.msra.mxu0 0.0
    %2213 = vmatprep.mubr.f32.mxu0 0.0
    %2214 = vmatmul.mubr.f32.gmra.mrb[0].mxu0 %v2144
    %v2215 = vpop.f32.mrb[0].mxu0
    %v2216 = vadd.f32 0.0, %v2215
    %v2217 = vpop.f32.mrb[0].mxu0
    %v2218 = vadd.f32 0.0, %v2217
    %2219 = vmatprep.mubr.f32.mxu0 0.0
    %2220 = vmatmul.mubr.f32.gmra.mrb[0].mxu0 %v2147
    %v2221 = vpop.f32.mrb[0].mxu0
    %v2222 = vadd.f32 0.0, %v2221
    %v2223 = vpop.f32.mrb[0].mxu0
    %v2224 = vadd.f32 0.0, %v2223
    %2225 = vdwg.mxu0
    %v2227 = vsel %vm711, %v2127, 0
    %v2230 = vsel %vm711, %v2132, 0
    %2232 = vmatprep.subr.mxu0 %v2136
    %2233 = vmatpush1.msra.mxu0 %v2135
    %2234 = vmatprep.subr.mxu0 %v2138
    %2235 = vmatpush1.msra.mxu0 %v2137
    %2236 = vmatprep.subr.mxu0 %v2140
    %2237 = vmatpush1.msra.mxu0 %v2139
    %2238 = vmatprep.subr.mxu0 %v2142
    %2239 = vmatpush1.msra.mxu0 %v2141
    %2240 = vmatprep.subr.mxu0 0.0
    %2241 = vmatpush1.msra.mxu0 0.0
    %2242 = vmatprep.subr.mxu0 0.0
    %2243 = vmatpush1.msra.mxu0 0.0
    %2244 = vmatprep.subr.mxu0 0.0
    %2245 = vmatpush1.msra.mxu0 0.0
    %2246 = vmatprep.subr.mxu0 0.0
    %2247 = vmatpush1.msra.mxu0 0.0
    %2248 = vmatprep.subr.mxu0 0.0
    %2249 = vmatpush1.msra.mxu0 0.0
    %2250 = vmatprep.subr.mxu0 0.0
    %2251 = vmatpush1.msra.mxu0 0.0
    %2252 = vmatprep.subr.mxu0 0.0
    %2253 = vmatpush1.msra.mxu0 0.0
    %2254 = vmatprep.subr.mxu0 0.0
    %2255 = vmatpush1.msra.mxu0 0.0
    %2256 = vmatprep.subr.mxu0 0.0
    %2257 = vmatpush1.msra.mxu0 0.0
    %2258 = vmatprep.subr.mxu0 0.0
    %2259 = vmatpush1.msra.mxu0 0.0
    %2260 = vmatprep.subr.mxu0 0.0
    %2261 = vmatpush1.msra.mxu0 0.0
    %2262 = vmatprep.subr.mxu0 0.0
    %2263 = vmatpush1.msra.mxu0 0.0
    %2264 = vmatprep.subr.mxu0 0.0
    %2265 = vmatpush1.msra.mxu0 0.0
    %2266 = vmatprep.subr.mxu0 0.0
    %2267 = vmatpush1.msra.mxu0 0.0
    %2268 = vmatprep.subr.mxu0 0.0
    %2269 = vmatpush1.msra.mxu0 0.0
    %2270 = vmatprep.subr.mxu0 0.0
    %2271 = vmatpush1.msra.mxu0 0.0
    %2272 = vmatprep.subr.mxu0 0.0
    %2273 = vmatpush1.msra.mxu0 0.0
    %2274 = vmatprep.subr.mxu0 0.0
    %2275 = vmatpush1.msra.mxu0 0.0
    %2276 = vmatprep.subr.mxu0 0.0
    %2277 = vmatpush1.msra.mxu0 0.0
    %2278 = vmatprep.subr.mxu0 0.0
    %2279 = vmatpush1.msra.mxu0 0.0
    %2280 = vmatprep.subr.mxu0 0.0
    %2281 = vmatpush1.msra.mxu0 0.0
    %2282 = vmatprep.subr.mxu0 0.0
    %2283 = vmatpush1.msra.mxu0 0.0
    %2284 = vmatprep.subr.mxu0 0.0
    %2285 = vmatpush1.msra.mxu0 0.0
    %2286 = vmatprep.subr.mxu0 0.0
    %2287 = vmatpush1.msra.mxu0 0.0
    %2288 = vmatprep.subr.mxu0 0.0
    %2289 = vmatpush1.msra.mxu0 0.0
    %2290 = vmatprep.subr.mxu0 0.0
    %2291 = vmatpush1.msra.mxu0 0.0
    %2292 = vmatprep.subr.mxu0 0.0
    %2293 = vmatpush1.msra.mxu0 0.0
    %2294 = vmatprep.subr.mxu0 0.0
    %2295 = vmatpush1.msra.mxu0 0.0
    %2296 = vmatprep.mubr.f32.mxu0 0.0
    %2297 = vmatmul.mubr.f32.gmra.mrb[0].mxu0 %v2227
    %v2298 = vpop.f32.mrb[0].mxu0
    %v2299 = vadd.f32 %v2216, %v2298
    %v2300 = vpop.f32.mrb[0].mxu0
    %v2301 = vadd.f32 %v2218, %v2300
    %2302 = vmatprep.mubr.f32.mxu0 0.0
    %2303 = vmatmul.mubr.f32.gmra.mrb[0].mxu0 %v2230
    %v2304 = vpop.f32.mrb[0].mxu0
    %v2305 = vadd.f32 %v2222, %v2304
    %v2306 = vpop.f32.mrb[0].mxu0
    %v2307 = vadd.f32 %v2224, %v2306
    %2308 = vdwg.mxu0
    %v2309 = vmax.f32 %v2299, 0.0
    %v2310 = vmax.f32 %v2301, 0.0
    %v2311 = vmax.f32 %v2305, 0.0
    %v2312 = vmax.f32 %v2307, 0.0
    %2313 = vset.pattern.permute.xlu0 1
    %2314 = vperm.xlu0 %2313, %v2041
    %v2315 = vpop.permute.xlu0 %2314
    %2317 = vset.pattern.permute.xlu0 1
    %2318 = vperm.xlu0 %2317, %v2042
    %v2319 = vpop.permute.xlu0 %2318
    %v2321 = vmul.f32 %v2315, %v2309
    %v2322 = vmul.f32 %v2315, %v2310
    %v2323 = vmul.f32 %v2319, %v2311
    %v2324 = vmul.f32 %v2319, %v2312
    %v2325 = vadd.f32 %v2321, %v2323
    %v2326 = vrot.slane %v2325, 4
    %v2327 = vadd.f32 %v2325, %v2326
    %v2328 = vrot.slane %v2327, 2
    %v2329 = vadd.f32 %v2327, %v2328
    %v2330 = vrot.slane %v2329, 1
    %v2331 = vadd.f32 %v2329, %v2330
    %v2332 = vadd.f32 %v2322, %v2324
    %v2333 = vrot.slane %v2332, 4
    %v2334 = vadd.f32 %v2332, %v2333
    %v2335 = vrot.slane %v2334, 2
    %v2336 = vadd.f32 %v2334, %v2335
    %v2337 = vrot.slane %v2336, 1
    %v2338 = vadd.f32 %v2336, %v2337
    %2340 = vset.pattern.permute.xlu0 2
    %2341 = vperm.xlu0 %2340, %v2043
    %v2342 = vpop.permute.xlu0 %2341
    %v2344 = vadd.f32 %v2331, %v2342
    %v2345 = vadd.f32 %v2338, %v2342
    %v2348 = vcombine.low %v2344, %v2345
    %v2350 = vunpack.c.l.s4 1966171168
    %v2351 = vunpack.c.0.s8 %v2350
    %v2352 = vlaneseq
    %v2353 = vshrl.u32 %v2352, 7
    %v2354 = vsub.s32 %v2351, %v2353
    %v2355 = vrot.slane %v2348, %v2354
    %v2357 = vunpack.c.l.s4 1966171168
    %v2358 = vunpack.c.0.s8 %v2357
    %v2359 = vlaneseq
    %v2360 = vshrl.u32 %v2359, 7
    %v2361 = vsub.s32 %v2358, %v2360
    %v2362 = vrot.slane %v2355, %v2361
    %v2364 = vlaneseq
    %vm2365 = vcmp.ge.s32.totalorder %v2364, 0
    %vm2366 = vcmp.lt.s32.totalorder %v2364, 256
    %vm2367 = vmand %vm2365, %vm2366
    %2368 = vst.msk [vmem:[%s10] sm:$0x3] %vm2367, %v2362
    // Predicated region
    $region62: #{forward.1} parent=1 // pred_check
      _
    $region63: #{forward.1} parent=1 // pred_check_branch
      %2370 = sbr.rel (0) target = $region65
    $region64: #{forward.1} parent=1 // pred_region
      _
    $region65: #{forward.1} parent=1 // pred_fallthru
      _
    // Predicated region
    $region66: #{forward.1} parent=1 // pred_check
      _
    $region67: #{forward.1} parent=1 // pred_check_branch
      %2372 = sbr.rel (0) target = $region69
    $region68: #{forward.1} parent=1 // pred_region
      _
    $region69: #{forward.1} parent=1 // pred_fallthru
      _
    %2373 = vsyncpa [#allocation3], 1
    %2374 = vsyncpa [#allocation5], 1
    %2375 = vsyncpa [#allocation8], 1

</llo_original>
